<compile_context>
chip_gen: v7x
topology: tpu7x:2x2x1
jax: 0.10.0
libtpu: 0.0.40
codegen_flags: <defaults>
</compile_context>

<pallas_src>
import functools

import jax
import jax.numpy as jnp
from jax.experimental import pallas as pl
from jax.experimental.pallas import tpu as pltpu

N_STEPS = 8
BATCH = 2
IN_DIM = 784
HID_DIM = 400
TAU = 0.25      # LIF membrane decay
VTH = 1.0       # LIF firing threshold


def _disc_mp_kernel(x_ref, w1_ref, b1_ref, w2t_ref, b2_ref, out_ref, *,
                    n_steps, batch):
    """Single invocation (no grid); all operands VMEM-resident.

    x_ref  : (n_steps*batch, IN_DIM) f32   time-major spikes, (T,B) flattened into M
    w1_ref : (IN_DIM, HID_PAD)       bf16  zero-padded 400 -> 512 (lane dense)
    b1_ref : (1, HID_PAD)            f32
    w2t_ref: (1, HID_PAD)            f32   W2 pre-transposed to a lane row
    b2_ref : (1, 1)                  f32
    out_ref: (batch, 1)              f32
    """
    # ---- Hoisted time-independent matmul: one bf16 MXU pass, f32 accumulation.
    # Spikes are {0,1} so the bf16 cast of x is exact.
    x = x_ref[...].astype(jnp.bfloat16)
    h_all = jnp.dot(x, w1_ref[...],
                    preferred_element_type=jnp.float32) + b1_ref[...]

    hid = h_all.shape[-1]
    mem = jnp.zeros((batch, hid), jnp.float32)        # LIF membrane (vregs)
    spike_sum = jnp.zeros((batch, hid), jnp.float32)  # Sigma_t spike_t (vregs)

    # ---- Sequential LIF recurrence: pure VPU work, statically unrolled.
    for t in range(n_steps):
        h_t = h_all[t * batch:(t + 1) * batch, :]
        mem = mem * TAU + h_t
        spike = (mem > VTH).astype(jnp.float32)
        mem = mem * (1.0 - spike)                     # hard reset
        spike_sum = spike_sum + spike

    # ---- MPNode is pure accumulation:
    #   Sigma_t (spike_t @ W2 + b2) == spike_sum . w2 (lane reduce) + n_steps*b2
    # VPU multiply + XLU lane reduction instead of an N=1 MXU matmul.
    o = jnp.sum(spike_sum * w2t_ref[...], axis=-1, keepdims=True)
    o = o + jnp.float32(n_steps) * b2_ref[...]

    # Final MPNode membrane / n_steps -> sigmoid (runtime n_steps).
    out_ref[...] = jax.nn.sigmoid(o * (1.0 / jnp.float32(n_steps))).astype(
        out_ref.dtype)


def prepare_params(w1, b1, w2, b2):
    """One-time (outside jit / training loop) parameter layout prep.

    Pads the hidden dim 400 -> 512 (lane dense), stores W1 in bf16 and W2 as a
    pre-transposed (1, HID_PAD) f32 row.  Doing this once avoids re-padding
    inside the per-call jit (which would triple the W1 HBM traffic).
    """
    hid = w1.shape[1]
    hid_pad = ((hid + 127) // 128) * 128
    pad = hid_pad - hid
    w1p = jnp.pad(w1, ((0, 0), (0, pad))).astype(jnp.bfloat16)
    b1p = jnp.pad(b1, ((0, 0), (0, pad))).astype(jnp.float32)
    w2tp = jnp.pad(w2, ((0, pad), (0, 0))).astype(jnp.float32).T  # (1, hid_pad)
    b2p = b2.astype(jnp.float32)
    return w1p, b1p, w2tp, b2p


@jax.jit
def discriminator_mp(inputs, w1p, b1p, w2tp, b2):
    """inputs: (n_steps, batch, 784) float32 spikes. Params from prepare_params.

    Returns (batch, 1) in (0, 1).
    """
    n_steps, batch, in_dim = inputs.shape
    hid_pad = w1p.shape[1]

    # Fold time into the matmul M dimension: (T*B, 784); row-major reshape, no copy.
    x2d = inputs.reshape(n_steps * batch, in_dim)

    kernel = functools.partial(_disc_mp_kernel, n_steps=n_steps, batch=batch)

    flops = (2 * n_steps * batch * in_dim * hid_pad        # W1 matmul
             + 5 * n_steps * batch * hid_pad               # LIF recurrence
             + 3 * batch * hid_pad)                        # finalize reduce
    bytes_accessed = (x2d.size * 4 + w1p.size * 2 + b1p.size * 4
                      + w2tp.size * 4 + b2.size * 4 + batch * 4)
    cost = pl.CostEstimate(flops=flops,
                           transcendentals=2 * batch,      # sigmoid exps
                           bytes_accessed=bytes_accessed)

    return pl.pallas_call(
        kernel,
        out_shape=jax.ShapeDtypeStruct((batch, 1), jnp.float32),
        in_specs=[pl.BlockSpec(memory_space=pltpu.MemorySpace.VMEM)
                  for _ in range(5)],
        out_specs=pl.BlockSpec(memory_space=pltpu.MemorySpace.VMEM),
        cost_estimate=cost,
    )(x2d, w1p, b1p, w2tp, b2)


def _reference(inputs, w1, b1, w2, b2):
    """Pure-JAX reference of the same forward pass (per-step, unpadded)."""
    n_steps = inputs.shape[0]
    lif = jnp.zeros((inputs.shape[1], w1.shape[1]), jnp.float32)
    mp = jnp.zeros((inputs.shape[1], 1), jnp.float32)
    for t in range(n_steps):
        h = inputs[t] @ w1 + b1
        mem = lif * TAU + h
        spike = (mem > VTH).astype(jnp.float32)
        lif = mem * (1.0 - spike)
        o = spike @ w2 + b2
        mp = mp + o
    return jax.nn.sigmoid(mp / n_steps)


if __name__ == "__main__":
    key = jax.random.PRNGKey(0)
    k_x, k_w1, k_b1, k_w2, k_b2 = jax.random.split(key, 5)

    # Binary spike-train inputs, time-major: (n_steps, batch, 784)
    x = (jax.random.uniform(k_x, (N_STEPS, BATCH, IN_DIM)) < 0.3).astype(
        jnp.float32)

    # Deterministic Linear params (PyTorch W is (out,in); stored transposed)
    lim1 = 1.0 / jnp.sqrt(jnp.float32(IN_DIM))
    w1 = jax.random.uniform(k_w1, (IN_DIM, HID_DIM), jnp.float32, -lim1, lim1)
    b1 = jax.random.uniform(k_b1, (1, HID_DIM), jnp.float32, -lim1, lim1)
    lim2 = 1.0 / jnp.sqrt(jnp.float32(HID_DIM))
    w2 = jax.random.uniform(k_w2, (HID_DIM, 1), jnp.float32, -lim2, lim2)
    b2 = jax.random.uniform(k_b2, (1, 1), jnp.float32, -lim2, lim2)

    # One-time parameter prep (padding + bf16 + W2 transpose), outside the jit.
    params = prepare_params(w1, b1, w2, b2)

    out = discriminator_mp(x, *params)
    out = jax.block_until_ready(out)

    # Reference uses the same bf16-rounded W1 (promoted to f32) so the spike
    # decisions mirror the kernel's bf16 weight storage; everything else f32.
    w1_rounded = w1.astype(jnp.bfloat16).astype(jnp.float32)
    ref = _reference(x, w1_rounded, b1, w2, b2)

    assert out.shape == (BATCH, 1)
    assert jnp.allclose(out, ref, atol=1e-5, rtol=1e-5), (out, ref)

    print("KERNEL_OK")
</pallas_src>

<mosaic_0001>
module attributes {stable_mosaic.version = 11 : i64} {
  func.func @_disc_mp_kernel(%arg0: memref<16x784xf32, #tpu.memory_space<vmem>>, %arg1: memref<784x512xbf16, #tpu.memory_space<vmem>>, %arg2: memref<1x512xf32, #tpu.memory_space<vmem>>, %arg3: memref<1x512xf32, #tpu.memory_space<vmem>>, %arg4: memref<1x1xf32, #tpu.memory_space<vmem>>, %arg5: memref<2x1xf32, #tpu.memory_space<vmem>>) attributes {dimension_semantics = [], scalar_prefetch = 0 : i64, scratch_operands = 0 : i64, tpu.core_type = #tpu.core_type<tc>} {
    %c0 = arith.constant 0 : index
    %c0_0 = arith.constant 0 : index
    %0 = vector.load %arg0[%c0, %c0_0] : memref<16x784xf32, #tpu.memory_space<vmem>>, vector<16x784xf32>
    %1 = arith.truncf %0 : vector<16x784xf32> to vector<16x784xbf16>
    %c0_1 = arith.constant 0 : index
    %c0_2 = arith.constant 0 : index
    %2 = vector.load %arg1[%c0_1, %c0_2] : memref<784x512xbf16, #tpu.memory_space<vmem>>, vector<784x512xbf16>
    %cst = arith.constant dense<0.000000e+00> : vector<16x512xf32>
    %3 = tpu.matmul %1, %2, %cst {dimension_numbers = #tpu.dot_dimension_numbers<[1], [0], [0], [1], [0, 0, 1, 1], [], []>} : vector<16x784xbf16>, vector<784x512xbf16>, vector<16x512xf32> -> vector<16x512xf32>
    %c0_3 = arith.constant 0 : index
    %c0_4 = arith.constant 0 : index
    %4 = vector.load %arg2[%c0_3, %c0_4] : memref<1x512xf32, #tpu.memory_space<vmem>>, vector<1x512xf32>
    %5 = vector.broadcast %4 : vector<1x512xf32> to vector<16x512xf32>
    %6 = arith.addf %3, %5 : vector<16x512xf32>
    %cst_5 = arith.constant 0.000000e+00 : f32
    %7 = vector.broadcast %cst_5 : f32 to vector<2x512xf32>
    %cst_6 = arith.constant 0.000000e+00 : f32
    %8 = vector.broadcast %cst_6 : f32 to vector<2x512xf32>
    %9 = vector.extract_strided_slice %6 {offsets = [0, 0], sizes = [2, 512], strides = [1, 1]} : vector<16x512xf32> to vector<2x512xf32>
    %cst_7 = arith.constant 2.500000e-01 : f32
    %10 = vector.broadcast %cst_7 : f32 to vector<2x512xf32>
    %11 = arith.mulf %7, %10 : vector<2x512xf32>
    %12 = arith.addf %11, %9 : vector<2x512xf32>
    %cst_8 = arith.constant 1.000000e+00 : f32
    %13 = vector.broadcast %cst_8 : f32 to vector<2x512xf32>
    %14 = arith.cmpf ogt, %12, %13 : vector<2x512xf32>
    %15 = arith.extui %14 : vector<2x512xi1> to vector<2x512xi32>
    %16 = arith.sitofp %15 : vector<2x512xi32> to vector<2x512xf32>
    %cst_9 = arith.constant 1.000000e+00 : f32
    %17 = vector.broadcast %cst_9 : f32 to vector<2x512xf32>
    %18 = arith.subf %17, %16 : vector<2x512xf32>
    %19 = arith.mulf %12, %18 : vector<2x512xf32>
    %20 = arith.addf %8, %16 : vector<2x512xf32>
    %21 = vector.extract_strided_slice %6 {offsets = [2, 0], sizes = [2, 512], strides = [1, 1]} : vector<16x512xf32> to vector<2x512xf32>
    %cst_10 = arith.constant 2.500000e-01 : f32
    %22 = vector.broadcast %cst_10 : f32 to vector<2x512xf32>
    %23 = arith.mulf %19, %22 : vector<2x512xf32>
    %24 = arith.addf %23, %21 : vector<2x512xf32>
    %cst_11 = arith.constant 1.000000e+00 : f32
    %25 = vector.broadcast %cst_11 : f32 to vector<2x512xf32>
    %26 = arith.cmpf ogt, %24, %25 : vector<2x512xf32>
    %27 = arith.extui %26 : vector<2x512xi1> to vector<2x512xi32>
    %28 = arith.sitofp %27 : vector<2x512xi32> to vector<2x512xf32>
    %cst_12 = arith.constant 1.000000e+00 : f32
    %29 = vector.broadcast %cst_12 : f32 to vector<2x512xf32>
    %30 = arith.subf %29, %28 : vector<2x512xf32>
    %31 = arith.mulf %24, %30 : vector<2x512xf32>
    %32 = arith.addf %20, %28 : vector<2x512xf32>
    %33 = vector.extract_strided_slice %6 {offsets = [4, 0], sizes = [2, 512], strides = [1, 1]} : vector<16x512xf32> to vector<2x512xf32>
    %cst_13 = arith.constant 2.500000e-01 : f32
    %34 = vector.broadcast %cst_13 : f32 to vector<2x512xf32>
    %35 = arith.mulf %31, %34 : vector<2x512xf32>
    %36 = arith.addf %35, %33 : vector<2x512xf32>
    %cst_14 = arith.constant 1.000000e+00 : f32
    %37 = vector.broadcast %cst_14 : f32 to vector<2x512xf32>
    %38 = arith.cmpf ogt, %36, %37 : vector<2x512xf32>
    %39 = arith.extui %38 : vector<2x512xi1> to vector<2x512xi32>
    %40 = arith.sitofp %39 : vector<2x512xi32> to vector<2x512xf32>
    %cst_15 = arith.constant 1.000000e+00 : f32
    %41 = vector.broadcast %cst_15 : f32 to vector<2x512xf32>
    %42 = arith.subf %41, %40 : vector<2x512xf32>
    %43 = arith.mulf %36, %42 : vector<2x512xf32>
    %44 = arith.addf %32, %40 : vector<2x512xf32>
    %45 = vector.extract_strided_slice %6 {offsets = [6, 0], sizes = [2, 512], strides = [1, 1]} : vector<16x512xf32> to vector<2x512xf32>
    %cst_16 = arith.constant 2.500000e-01 : f32
    %46 = vector.broadcast %cst_16 : f32 to vector<2x512xf32>
    %47 = arith.mulf %43, %46 : vector<2x512xf32>
    %48 = arith.addf %47, %45 : vector<2x512xf32>
    %cst_17 = arith.constant 1.000000e+00 : f32
    %49 = vector.broadcast %cst_17 : f32 to vector<2x512xf32>
    %50 = arith.cmpf ogt, %48, %49 : vector<2x512xf32>
    %51 = arith.extui %50 : vector<2x512xi1> to vector<2x512xi32>
    %52 = arith.sitofp %51 : vector<2x512xi32> to vector<2x512xf32>
    %cst_18 = arith.constant 1.000000e+00 : f32
    %53 = vector.broadcast %cst_18 : f32 to vector<2x512xf32>
    %54 = arith.subf %53, %52 : vector<2x512xf32>
    %55 = arith.mulf %48, %54 : vector<2x512xf32>
    %56 = arith.addf %44, %52 : vector<2x512xf32>
    %57 = vector.extract_strided_slice %6 {offsets = [8, 0], sizes = [2, 512], strides = [1, 1]} : vector<16x512xf32> to vector<2x512xf32>
    %cst_19 = arith.constant 2.500000e-01 : f32
    %58 = vector.broadcast %cst_19 : f32 to vector<2x512xf32>
    %59 = arith.mulf %55, %58 : vector<2x512xf32>
    %60 = arith.addf %59, %57 : vector<2x512xf32>
    %cst_20 = arith.constant 1.000000e+00 : f32
    %61 = vector.broadcast %cst_20 : f32 to vector<2x512xf32>
    %62 = arith.cmpf ogt, %60, %61 : vector<2x512xf32>
    %63 = arith.extui %62 : vector<2x512xi1> to vector<2x512xi32>
    %64 = arith.sitofp %63 : vector<2x512xi32> to vector<2x512xf32>
    %cst_21 = arith.constant 1.000000e+00 : f32
    %65 = vector.broadcast %cst_21 : f32 to vector<2x512xf32>
    %66 = arith.subf %65, %64 : vector<2x512xf32>
    %67 = arith.mulf %60, %66 : vector<2x512xf32>
    %68 = arith.addf %56, %64 : vector<2x512xf32>
    %69 = vector.extract_strided_slice %6 {offsets = [10, 0], sizes = [2, 512], strides = [1, 1]} : vector<16x512xf32> to vector<2x512xf32>
    %cst_22 = arith.constant 2.500000e-01 : f32
    %70 = vector.broadcast %cst_22 : f32 to vector<2x512xf32>
    %71 = arith.mulf %67, %70 : vector<2x512xf32>
    %72 = arith.addf %71, %69 : vector<2x512xf32>
    %cst_23 = arith.constant 1.000000e+00 : f32
    %73 = vector.broadcast %cst_23 : f32 to vector<2x512xf32>
    %74 = arith.cmpf ogt, %72, %73 : vector<2x512xf32>
    %75 = arith.extui %74 : vector<2x512xi1> to vector<2x512xi32>
    %76 = arith.sitofp %75 : vector<2x512xi32> to vector<2x512xf32>
    %cst_24 = arith.constant 1.000000e+00 : f32
    %77 = vector.broadcast %cst_24 : f32 to vector<2x512xf32>
    %78 = arith.subf %77, %76 : vector<2x512xf32>
    %79 = arith.mulf %72, %78 : vector<2x512xf32>
    %80 = arith.addf %68, %76 : vector<2x512xf32>
    %81 = vector.extract_strided_slice %6 {offsets = [12, 0], sizes = [2, 512], strides = [1, 1]} : vector<16x512xf32> to vector<2x512xf32>
    %cst_25 = arith.constant 2.500000e-01 : f32
    %82 = vector.broadcast %cst_25 : f32 to vector<2x512xf32>
    %83 = arith.mulf %79, %82 : vector<2x512xf32>
    %84 = arith.addf %83, %81 : vector<2x512xf32>
    %cst_26 = arith.constant 1.000000e+00 : f32
    %85 = vector.broadcast %cst_26 : f32 to vector<2x512xf32>
    %86 = arith.cmpf ogt, %84, %85 : vector<2x512xf32>
    %87 = arith.extui %86 : vector<2x512xi1> to vector<2x512xi32>
    %88 = arith.sitofp %87 : vector<2x512xi32> to vector<2x512xf32>
    %cst_27 = arith.constant 1.000000e+00 : f32
    %89 = vector.broadcast %cst_27 : f32 to vector<2x512xf32>
    %90 = arith.subf %89, %88 : vector<2x512xf32>
    %91 = arith.mulf %84, %90 : vector<2x512xf32>
    %92 = arith.addf %80, %88 : vector<2x512xf32>
    %93 = vector.extract_strided_slice %6 {offsets = [14, 0], sizes = [2, 512], strides = [1, 1]} : vector<16x512xf32> to vector<2x512xf32>
    %cst_28 = arith.constant 2.500000e-01 : f32
    %94 = vector.broadcast %cst_28 : f32 to vector<2x512xf32>
    %95 = arith.mulf %91, %94 : vector<2x512xf32>
    %96 = arith.addf %95, %93 : vector<2x512xf32>
    %cst_29 = arith.constant 1.000000e+00 : f32
    %97 = vector.broadcast %cst_29 : f32 to vector<2x512xf32>
    %98 = arith.cmpf ogt, %96, %97 : vector<2x512xf32>
    %99 = arith.extui %98 : vector<2x512xi1> to vector<2x512xi32>
    %100 = arith.sitofp %99 : vector<2x512xi32> to vector<2x512xf32>
    %101 = arith.addf %92, %100 : vector<2x512xf32>
    %c0_30 = arith.constant 0 : index
    %c0_31 = arith.constant 0 : index
    %102 = vector.load %arg3[%c0_30, %c0_31] : memref<1x512xf32, #tpu.memory_space<vmem>>, vector<1x512xf32>
    %103 = vector.broadcast %102 : vector<1x512xf32> to vector<2x512xf32>
    %104 = arith.mulf %101, %103 : vector<2x512xf32>
    %cst_32 = arith.constant dense<0.000000e+00> : vector<2xf32>
    %105 = vector.multi_reduction <add>, %104, %cst_32 [1] : vector<2x512xf32> to vector<2xf32>
    %106 = vector.shape_cast %105 : vector<2xf32> to vector<2x1xf32>
    %c0_33 = arith.constant 0 : index
    %c0_34 = arith.constant 0 : index
    %107 = vector.load %arg4[%c0_33, %c0_34] : memref<1x1xf32, #tpu.memory_space<vmem>>, vector<1x1xf32>
    %cst_35 = arith.constant 8.000000e+00 : f32
    %108 = vector.broadcast %cst_35 : f32 to vector<1x1xf32>
    %109 = arith.mulf %108, %107 : vector<1x1xf32>
    %110 = vector.broadcast %109 : vector<1x1xf32> to vector<2x1xf32>
    %111 = arith.addf %106, %110 : vector<2x1xf32>
    %cst_36 = arith.constant 1.000000e+00 : f32
    %cst_37 = arith.constant 8.000000e+00 : f32
    %112 = arith.divf %cst_36, %cst_37 : f32
    %113 = vector.broadcast %112 : f32 to vector<2x1xf32>
    %114 = arith.mulf %111, %113 : vector<2x1xf32>
    %115 = arith.negf %114 : vector<2x1xf32>
    %116 = math.exp %115 : vector<2x1xf32>
    %cst_38 = arith.constant 1.000000e+00 : f32
    %117 = vector.broadcast %cst_38 : f32 to vector<2x1xf32>
    %118 = arith.addf %117, %116 : vector<2x1xf32>
    %119 = arith.divf %117, %118 : vector<2x1xf32>
    %c0_39 = arith.constant 0 : index
    %c0_40 = arith.constant 0 : index
    %120 = vector.load %arg5[%c0_39, %c0_40] : memref<2x1xf32, #tpu.memory_space<vmem>>, vector<2x1xf32>
    tpu.vector_store %arg5[%c0_39, %c0_40], %119 {strides = array<i32>} : memref<2x1xf32, #tpu.memory_space<vmem>>, vector<2x1xf32>,
    return
  }
}

</mosaic_0001>

<llo_original>
// kernel: discriminator_mp.1
$region0: #{discriminator_mp.1}
  #allocation0 [shape = 'u32[]', space=smem, size = 0x4, offset = 0x4, fixed_abs, tag = 'smem constant byte address 0x4 - core index']
  #allocation1 [shape = 'u32[144,128]{1,0:T(1,128)}', space=vmem, size = 0x12000, scoped, tag = 'internal scratch']
  #allocation2 [shape = 'f32[1,1]{1,0:T(1,128)S(1)}', space=vmem, size = 0x200, scoped, tag = 'scoped memory for discriminator_mp.1']
  %s0 = inlined_call_operand.vmem [shape: f32[16,784], index: 0, kind: input, shape index: {}]
  %s1 = inlined_call_operand.hbm [shape: bf16[784,512], index: 1, kind: input, shape index: {}]
  %s2 = inlined_call_operand.vmem [shape: f32[1,512], index: 2, kind: input, shape index: {}]
  %s3 = inlined_call_operand.vmem [shape: f32[1,512], index: 3, kind: input, shape index: {}]
  %s4 = inlined_call_operand.<no memory space> [shape: f32[1,1], index: 4, kind: input, shape index: {}]
  %s5 = inlined_call_operand.vmem [shape: f32[2,1], index: 5, kind: output, shape index: {}]
  %s6 = sld [smem:[#allocation0]]
  $region34: #{discriminator_mp.1} parent=0
    _
  %s8 = ssub.s32 1, %s6
  %s9 = scalar_select 0, %s8, %s6
  %v10 = vstv %s4
  %11 = vst [vmem:[#allocation2] sm:$0x1] %v10
  $region1: #{discriminator_mp.1} parent=0
    #allocation3 [shape = 'u8[802816]{0}', space=vmem, size = 0xc4000, scoped, tag = 'input window, operand 1, single buffered']
    #allocation4 [shape = 's32[1]{0}', space=sflag, size = 0x4, scoped, tag = 'scoped memory for discriminator_mp.1']
    %12 = vsyncpa [#allocation4], 0
    // Predicated region
    $region2: #{discriminator_mp.1} parent=1 // pred_check
      _
    $region3: #{discriminator_mp.1} parent=1 // pred_check_branch
      %14 = sbr.rel (0) target = $region5
    $region4: #{discriminator_mp.1} parent=1 // pred_region
      _
    $region5: #{discriminator_mp.1} parent=1 // pred_fallthru
      _
    // Predicated region
    $region6: #{discriminator_mp.1} parent=1 // pred_check
      _
    $region7: #{discriminator_mp.1} parent=1 // pred_check_branch
      %16 = sbr.rel (0) target = $region9
    $region8: #{discriminator_mp.1} parent=1 // pred_region
      %s18 = ssub.s32 25088, 25088
      %19 = vsyncadd [#allocation4], %s18
      %s20 = sshll.u32 [#allocation3], 4
      %s21 = int_to_ptr.vmem [resolvable:$true] %s20
      %26 = dma.hbm_to_vmem [thread:$0]  %s1, 25088, %s21, [#allocation4], 256, 256, 16
    $region9: #{discriminator_mp.1} parent=1 // pred_fallthru
      _
    // Predicated region
    $region10: #{discriminator_mp.1} parent=1 // pred_check
      _
    $region11: #{discriminator_mp.1} parent=1 // pred_check_branch
      %28 = sbr.rel (0) target = $region13
    $region12: #{discriminator_mp.1} parent=1 // pred_region
      _
    $region13: #{discriminator_mp.1} parent=1 // pred_fallthru
      _
    // Predicated region
    $region14: #{discriminator_mp.1} parent=1 // pred_check
      _
    $region15: #{discriminator_mp.1} parent=1 // pred_check_branch
      %30 = sbr.rel (0) target = $region17
    $region16: #{discriminator_mp.1} parent=1 // pred_region
      _
    $region17: #{discriminator_mp.1} parent=1 // pred_fallthru
      _
    // Predicated region
    $region18: #{discriminator_mp.1} parent=1 // pred_check
      _
    $region19: #{discriminator_mp.1} parent=1 // pred_check_branch
      %32 = sbr.rel (0) target = $region21
    $region20: #{discriminator_mp.1} parent=1 // pred_region
      _
    $region21: #{discriminator_mp.1} parent=1 // pred_fallthru
      _
    // Predicated region
    $region22: #{discriminator_mp.1} parent=1 // pred_check
      _
    $region23: #{discriminator_mp.1} parent=1 // pred_check_branch
      %34 = sbr.rel (0) target = $region25
    $region24: #{discriminator_mp.1} parent=1 // pred_region
      %35 = dma.done [#allocation4], 25088
    $region25: #{discriminator_mp.1} parent=1 // pred_fallthru
      _
    %v37 = vld [vmem:[%s0] sm:$0xff]
    %v38 = vld [vmem:[%s0 + $0x8] sm:$0xff]
    %v39 = vld [vmem:[%s0 + $0x10] sm:$0xff]
    %v40 = vld [vmem:[%s0 + $0x18] sm:$0xff]
    %v41 = vld [vmem:[%s0 + $0x20] sm:$0xff]
    %v42 = vld [vmem:[%s0 + $0x28] sm:$0xff]
    %v43 = vld [vmem:[%s0 + $0x30] sm:$0xff]
    %v44 = vld [vmem:[%s0 + $0x38] sm:$0xff]
    %v45 = vld [vmem:[%s0 + $0x40] sm:$0xff]
    %v46 = vld [vmem:[%s0 + $0x48] sm:$0xff]
    %v47 = vld [vmem:[%s0 + $0x50] sm:$0xff]
    %v48 = vld [vmem:[%s0 + $0x58] sm:$0xff]
    %v49 = vld [vmem:[%s0 + $0x60] sm:$0xff]
    %v50 = vld [vmem:[%s0 + $0x68] sm:$0xff]
    %v51 = vpack.c.bf16 %v44, %v37
    %v52 = vpack.c.bf16 %v45, %v38
    %v53 = vpack.c.bf16 %v46, %v39
    %v54 = vpack.c.bf16 %v47, %v40
    %v55 = vpack.c.bf16 %v48, %v41
    %v56 = vpack.c.bf16 %v49, %v42
    %v57 = vpack.c.bf16 %v50, %v43
    %v58 = vld [vmem:[#allocation3] sm:$0xff]
    %v59 = vld [vmem:[#allocation3 + $0x8] sm:$0xff]
    %v60 = vld [vmem:[#allocation3 + $0x10] sm:$0xff]
    %v61 = vld [vmem:[#allocation3 + $0x18] sm:$0xff]
    %v62 = vld [vmem:[#allocation3 + $0x20] sm:$0xff]
    %v63 = vld [vmem:[#allocation3 + $0x28] sm:$0xff]
    %v64 = vld [vmem:[#allocation3 + $0x30] sm:$0xff]
    %v65 = vld [vmem:[#allocation3 + $0x38] sm:$0xff]
    %v66 = vld [vmem:[#allocation3 + $0x40] sm:$0xff]
    %v67 = vld [vmem:[#allocation3 + $0x48] sm:$0xff]
    %v68 = vld [vmem:[#allocation3 + $0x50] sm:$0xff]
    %v69 = vld [vmem:[#allocation3 + $0x58] sm:$0xff]
    %v70 = vld [vmem:[#allocation3 + $0x60] sm:$0xff]
    %v71 = vld [vmem:[#allocation3 + $0x68] sm:$0xff]
    %v72 = vld [vmem:[#allocation3 + $0x70] sm:$0xff]
    %v73 = vld [vmem:[#allocation3 + $0x78] sm:$0xff]
    %v74 = vld [vmem:[#allocation3 + $0x80] sm:$0xff]
    %v75 = vld [vmem:[#allocation3 + $0x88] sm:$0xff]
    %v76 = vld [vmem:[#allocation3 + $0x90] sm:$0xff]
    %v77 = vld [vmem:[#allocation3 + $0x98] sm:$0xff]
    %v78 = vld [vmem:[#allocation3 + $0xa0] sm:$0xff]
    %v79 = vld [vmem:[#allocation3 + $0xa8] sm:$0xff]
    %v80 = vld [vmem:[#allocation3 + $0xb0] sm:$0xff]
    %v81 = vld [vmem:[#allocation3 + $0xb8] sm:$0xff]
    %v82 = vld [vmem:[#allocation3 + $0xc0] sm:$0xff]
    %v83 = vld [vmem:[#allocation3 + $0xc8] sm:$0xff]
    %v84 = vld [vmem:[#allocation3 + $0xd0] sm:$0xff]
    %v85 = vld [vmem:[#allocation3 + $0xd8] sm:$0xff]
    %v86 = vld [vmem:[#allocation3 + $0xe0] sm:$0xff]
    %v87 = vld [vmem:[#allocation3 + $0xe8] sm:$0xff]
    %v88 = vld [vmem:[#allocation3 + $0xf0] sm:$0xff]
    %v89 = vld [vmem:[#allocation3 + $0xf8] sm:$0xff]
    %v90 = vld [vmem:[#allocation3 + $0x100] sm:$0xff]
    %v91 = vld [vmem:[#allocation3 + $0x108] sm:$0xff]
    %v92 = vld [vmem:[#allocation3 + $0x110] sm:$0xff]
    %v93 = vld [vmem:[#allocation3 + $0x118] sm:$0xff]
    %v94 = vld [vmem:[#allocation3 + $0x120] sm:$0xff]
    %v95 = vld [vmem:[#allocation3 + $0x128] sm:$0xff]
    %v96 = vld [vmem:[#allocation3 + $0x130] sm:$0xff]
    %v97 = vld [vmem:[#allocation3 + $0x138] sm:$0xff]
    %v98 = vld [vmem:[#allocation3 + $0x140] sm:$0xff]
    %v99 = vld [vmem:[#allocation3 + $0x148] sm:$0xff]
    %v100 = vld [vmem:[#allocation3 + $0x150] sm:$0xff]
    %v101 = vld [vmem:[#allocation3 + $0x158] sm:$0xff]
    %v102 = vld [vmem:[#allocation3 + $0x160] sm:$0xff]
    %v103 = vld [vmem:[#allocation3 + $0x168] sm:$0xff]
    %v104 = vld [vmem:[#allocation3 + $0x170] sm:$0xff]
    %v105 = vld [vmem:[#allocation3 + $0x178] sm:$0xff]
    %v106 = vld [vmem:[#allocation3 + $0x180] sm:$0xff]
    %v107 = vld [vmem:[#allocation3 + $0x188] sm:$0xff]
    %v108 = vld [vmem:[#allocation3 + $0x190] sm:$0xff]
    %v109 = vld [vmem:[#allocation3 + $0x198] sm:$0xff]
    %v110 = vld [vmem:[#allocation3 + $0x1a0] sm:$0xff]
    %v111 = vld [vmem:[#allocation3 + $0x1a8] sm:$0xff]
    %v112 = vld [vmem:[#allocation3 + $0x1b0] sm:$0xff]
    %v113 = vld [vmem:[#allocation3 + $0x1b8] sm:$0xff]
    %v114 = vld [vmem:[#allocation3 + $0x1c0] sm:$0xff]
    %v115 = vld [vmem:[#allocation3 + $0x1c8] sm:$0xff]
    %v116 = vld [vmem:[#allocation3 + $0x1d0] sm:$0xff]
    %v117 = vld [vmem:[#allocation3 + $0x1d8] sm:$0xff]
    %v118 = vld [vmem:[#allocation3 + $0x1e0] sm:$0xff]
    %v119 = vld [vmem:[#allocation3 + $0x1e8] sm:$0xff]
    %v120 = vld [vmem:[#allocation3 + $0x1f0] sm:$0xff]
    %v121 = vld [vmem:[#allocation3 + $0x1f8] sm:$0xff]
    %v122 = vld [vmem:[#allocation3 + $0x200] sm:$0xff]
    %v123 = vld [vmem:[#allocation3 + $0x208] sm:$0xff]
    %v124 = vld [vmem:[#allocation3 + $0x210] sm:$0xff]
    %v125 = vld [vmem:[#allocation3 + $0x218] sm:$0xff]
    %v126 = vld [vmem:[#allocation3 + $0x220] sm:$0xff]
    %v127 = vld [vmem:[#allocation3 + $0x228] sm:$0xff]
    %v128 = vld [vmem:[#allocation3 + $0x230] sm:$0xff]
    %v129 = vld [vmem:[#allocation3 + $0x238] sm:$0xff]
    %v130 = vld [vmem:[#allocation3 + $0x240] sm:$0xff]
    %v131 = vld [vmem:[#allocation3 + $0x248] sm:$0xff]
    %v132 = vld [vmem:[#allocation3 + $0x250] sm:$0xff]
    %v133 = vld [vmem:[#allocation3 + $0x258] sm:$0xff]
    %v134 = vld [vmem:[#allocation3 + $0x260] sm:$0xff]
    %v135 = vld [vmem:[#allocation3 + $0x268] sm:$0xff]
    %v136 = vld [vmem:[#allocation3 + $0x270] sm:$0xff]
    %v137 = vld [vmem:[#allocation3 + $0x278] sm:$0xff]
    %v138 = vld [vmem:[#allocation3 + $0x280] sm:$0xff]
    %v139 = vld [vmem:[#allocation3 + $0x288] sm:$0xff]
    %v140 = vld [vmem:[#allocation3 + $0x290] sm:$0xff]
    %v141 = vld [vmem:[#allocation3 + $0x298] sm:$0xff]
    %v142 = vld [vmem:[#allocation3 + $0x2a0] sm:$0xff]
    %v143 = vld [vmem:[#allocation3 + $0x2a8] sm:$0xff]
    %v144 = vld [vmem:[#allocation3 + $0x2b0] sm:$0xff]
    %v145 = vld [vmem:[#allocation3 + $0x2b8] sm:$0xff]
    %v146 = vld [vmem:[#allocation3 + $0x2c0] sm:$0xff]
    %v147 = vld [vmem:[#allocation3 + $0x2c8] sm:$0xff]
    %v148 = vld [vmem:[#allocation3 + $0x2d0] sm:$0xff]
    %v149 = vld [vmem:[#allocation3 + $0x2d8] sm:$0xff]
    %v150 = vld [vmem:[#allocation3 + $0x2e0] sm:$0xff]
    %v151 = vld [vmem:[#allocation3 + $0x2e8] sm:$0xff]
    %v152 = vld [vmem:[#allocation3 + $0x2f0] sm:$0xff]
    %v153 = vld [vmem:[#allocation3 + $0x2f8] sm:$0xff]
    %v154 = vld [vmem:[#allocation3 + $0x300] sm:$0xff]
    %v155 = vld [vmem:[#allocation3 + $0x308] sm:$0xff]
    %v156 = vld [vmem:[#allocation3 + $0x310] sm:$0xff]
    %v157 = vld [vmem:[#allocation3 + $0x318] sm:$0xff]
    %v158 = vld [vmem:[#allocation3 + $0x320] sm:$0xff]
    %v159 = vld [vmem:[#allocation3 + $0x328] sm:$0xff]
    %v160 = vld [vmem:[#allocation3 + $0x330] sm:$0xff]
    %v161 = vld [vmem:[#allocation3 + $0x338] sm:$0xff]
    %v162 = vld [vmem:[#allocation3 + $0x340] sm:$0xff]
    %v163 = vld [vmem:[#allocation3 + $0x348] sm:$0xff]
    %v164 = vld [vmem:[#allocation3 + $0x350] sm:$0xff]
    %v165 = vld [vmem:[#allocation3 + $0x358] sm:$0xff]
    %v166 = vld [vmem:[#allocation3 + $0x360] sm:$0xff]
    %v167 = vld [vmem:[#allocation3 + $0x368] sm:$0xff]
    %v168 = vld [vmem:[#allocation3 + $0x370] sm:$0xff]
    %v169 = vld [vmem:[#allocation3 + $0x378] sm:$0xff]
    %v170 = vld [vmem:[#allocation3 + $0x380] sm:$0xff]
    %v171 = vld [vmem:[#allocation3 + $0x388] sm:$0xff]
    %v172 = vld [vmem:[#allocation3 + $0x390] sm:$0xff]
    %v173 = vld [vmem:[#allocation3 + $0x398] sm:$0xff]
    %v174 = vld [vmem:[#allocation3 + $0x3a0] sm:$0xff]
    %v175 = vld [vmem:[#allocation3 + $0x3a8] sm:$0xff]
    %v176 = vld [vmem:[#allocation3 + $0x3b0] sm:$0xff]
    %v177 = vld [vmem:[#allocation3 + $0x3b8] sm:$0xff]
    %v178 = vld [vmem:[#allocation3 + $0x3c0] sm:$0xff]
    %v179 = vld [vmem:[#allocation3 + $0x3c8] sm:$0xff]
    %v180 = vld [vmem:[#allocation3 + $0x3d0] sm:$0xff]
    %v181 = vld [vmem:[#allocation3 + $0x3d8] sm:$0xff]
    %v182 = vld [vmem:[#allocation3 + $0x3e0] sm:$0xff]
    %v183 = vld [vmem:[#allocation3 + $0x3e8] sm:$0xff]
    %v184 = vld [vmem:[#allocation3 + $0x3f0] sm:$0xff]
    %v185 = vld [vmem:[#allocation3 + $0x3f8] sm:$0xff]
    %v186 = vld [vmem:[#allocation3 + $0x400] sm:$0xff]
    %v187 = vld [vmem:[#allocation3 + $0x408] sm:$0xff]
    %v188 = vld [vmem:[#allocation3 + $0x410] sm:$0xff]
    %v189 = vld [vmem:[#allocation3 + $0x418] sm:$0xff]
    %v190 = vld [vmem:[#allocation3 + $0x420] sm:$0xff]
    %v191 = vld [vmem:[#allocation3 + $0x428] sm:$0xff]
    %v192 = vld [vmem:[#allocation3 + $0x430] sm:$0xff]
    %v193 = vld [vmem:[#allocation3 + $0x438] sm:$0xff]
    %v194 = vld [vmem:[#allocation3 + $0x440] sm:$0xff]
    %v195 = vld [vmem:[#allocation3 + $0x448] sm:$0xff]
    %v196 = vld [vmem:[#allocation3 + $0x450] sm:$0xff]
    %v197 = vld [vmem:[#allocation3 + $0x458] sm:$0xff]
    %v198 = vld [vmem:[#allocation3 + $0x460] sm:$0xff]
    %v199 = vld [vmem:[#allocation3 + $0x468] sm:$0xff]
    %v200 = vld [vmem:[#allocation3 + $0x470] sm:$0xff]
    %v201 = vld [vmem:[#allocation3 + $0x478] sm:$0xff]
    %v202 = vld [vmem:[#allocation3 + $0x480] sm:$0xff]
    %v203 = vld [vmem:[#allocation3 + $0x488] sm:$0xff]
    %v204 = vld [vmem:[#allocation3 + $0x490] sm:$0xff]
    %v205 = vld [vmem:[#allocation3 + $0x498] sm:$0xff]
    %v206 = vld [vmem:[#allocation3 + $0x4a0] sm:$0xff]
    %v207 = vld [vmem:[#allocation3 + $0x4a8] sm:$0xff]
    %v208 = vld [vmem:[#allocation3 + $0x4b0] sm:$0xff]
    %v209 = vld [vmem:[#allocation3 + $0x4b8] sm:$0xff]
    %v210 = vld [vmem:[#allocation3 + $0x4c0] sm:$0xff]
    %v211 = vld [vmem:[#allocation3 + $0x4c8] sm:$0xff]
    %v212 = vld [vmem:[#allocation3 + $0x4d0] sm:$0xff]
    %v213 = vld [vmem:[#allocation3 + $0x4d8] sm:$0xff]
    %v214 = vld [vmem:[#allocation3 + $0x4e0] sm:$0xff]
    %v215 = vld [vmem:[#allocation3 + $0x4e8] sm:$0xff]
    %v216 = vld [vmem:[#allocation3 + $0x4f0] sm:$0xff]
    %v217 = vld [vmem:[#allocation3 + $0x4f8] sm:$0xff]
    %v218 = vld [vmem:[#allocation3 + $0x500] sm:$0xff]
    %v219 = vld [vmem:[#allocation3 + $0x508] sm:$0xff]
    %v220 = vld [vmem:[#allocation3 + $0x510] sm:$0xff]
    %v221 = vld [vmem:[#allocation3 + $0x518] sm:$0xff]
    %v222 = vld [vmem:[#allocation3 + $0x520] sm:$0xff]
    %v223 = vld [vmem:[#allocation3 + $0x528] sm:$0xff]
    %v224 = vld [vmem:[#allocation3 + $0x530] sm:$0xff]
    %v225 = vld [vmem:[#allocation3 + $0x538] sm:$0xff]
    %v226 = vld [vmem:[#allocation3 + $0x540] sm:$0xff]
    %v227 = vld [vmem:[#allocation3 + $0x548] sm:$0xff]
    %v228 = vld [vmem:[#allocation3 + $0x550] sm:$0xff]
    %v229 = vld [vmem:[#allocation3 + $0x558] sm:$0xff]
    %v230 = vld [vmem:[#allocation3 + $0x560] sm:$0xff]
    %v231 = vld [vmem:[#allocation3 + $0x568] sm:$0xff]
    %v232 = vld [vmem:[#allocation3 + $0x570] sm:$0xff]
    %v233 = vld [vmem:[#allocation3 + $0x578] sm:$0xff]
    %v234 = vld [vmem:[#allocation3 + $0x580] sm:$0xff]
    %v235 = vld [vmem:[#allocation3 + $0x588] sm:$0xff]
    %v236 = vld [vmem:[#allocation3 + $0x590] sm:$0xff]
    %v237 = vld [vmem:[#allocation3 + $0x598] sm:$0xff]
    %v238 = vld [vmem:[#allocation3 + $0x5a0] sm:$0xff]
    %v239 = vld [vmem:[#allocation3 + $0x5a8] sm:$0xff]
    %v240 = vld [vmem:[#allocation3 + $0x5b0] sm:$0xff]
    %v241 = vld [vmem:[#allocation3 + $0x5b8] sm:$0xff]
    %v242 = vld [vmem:[#allocation3 + $0x5c0] sm:$0xff]
    %v243 = vld [vmem:[#allocation3 + $0x5c8] sm:$0xff]
    %v244 = vld [vmem:[#allocation3 + $0x5d0] sm:$0xff]
    %v245 = vld [vmem:[#allocation3 + $0x5d8] sm:$0xff]
    %v246 = vld [vmem:[#allocation3 + $0x5e0] sm:$0xff]
    %v247 = vld [vmem:[#allocation3 + $0x5e8] sm:$0xff]
    %v248 = vld [vmem:[#allocation3 + $0x5f0] sm:$0xff]
    %v249 = vld [vmem:[#allocation3 + $0x5f8] sm:$0xff]
    %v250 = vld [vmem:[#allocation3 + $0x600] sm:$0xff]
    %v251 = vld [vmem:[#allocation3 + $0x608] sm:$0xff]
    %v252 = vld [vmem:[#allocation3 + $0x610] sm:$0xff]
    %v253 = vld [vmem:[#allocation3 + $0x618] sm:$0xff]
    %v254 = vld [vmem:[%s2] sm:$0xf]
    %v256 = vlaneseq
    %v257 = vshrl.u32 %v256, 7
    %v258 = vsub.s32 0, %v257
    %v259 = vrot.slane %v254, %v258
    %v260 = vlaneseq
    %v261 = vshrl.u32 %v260, 7
    %v262 = vsub.s32 1, %v261
    %v263 = vrot.slane %v254, %v262
    %v264 = vlaneseq
    %v265 = vshrl.u32 %v264, 7
    %v266 = vsub.s32 2, %v265
    %v267 = vrot.slane %v254, %v266
    %v268 = vlaneseq
    %v269 = vshrl.u32 %v268, 7
    %v270 = vsub.s32 3, %v269
    %v271 = vrot.slane %v254, %v270
    %v472 = vunpack.c.l.b16 %v58
    %v473 = vunpack.c.h.b16 %v58
    %v474 = vunpack.c.l.b16 %v59
    %v475 = vunpack.c.h.b16 %v59
    %v476 = vunpack.c.l.b16 %v60
    %v477 = vunpack.c.h.b16 %v60
    %v478 = vunpack.c.l.b16 %v61
    %v479 = vunpack.c.h.b16 %v61
    %v480 = vunpack.c.l.b16 %v62
    %v481 = vunpack.c.h.b16 %v62
    %v482 = vunpack.c.l.b16 %v63
    %v483 = vunpack.c.h.b16 %v63
    %v484 = vunpack.c.l.b16 %v64
    %v485 = vunpack.c.h.b16 %v64
    %v486 = vunpack.c.l.b16 %v65
    %v487 = vunpack.c.h.b16 %v65
    %v488 = vunpack.c.l.b16 %v66
    %v489 = vunpack.c.h.b16 %v66
    %v490 = vunpack.c.l.b16 %v67
    %v491 = vunpack.c.h.b16 %v67
    %v492 = vunpack.c.l.b16 %v68
    %v493 = vunpack.c.h.b16 %v68
    %v494 = vunpack.c.l.b16 %v69
    %v495 = vunpack.c.h.b16 %v69
    %v496 = vunpack.c.l.b16 %v70
    %v497 = vunpack.c.h.b16 %v70
    %v498 = vunpack.c.l.b16 %v71
    %v499 = vunpack.c.h.b16 %v71
    %v500 = vunpack.c.l.b16 %v72
    %v501 = vunpack.c.h.b16 %v72
    %v502 = vunpack.c.l.b16 %v73
    %v503 = vunpack.c.h.b16 %v73
    %v504 = vunpack.c.l.b16 %v74
    %v505 = vunpack.c.h.b16 %v74
    %v506 = vunpack.c.l.b16 %v75
    %v507 = vunpack.c.h.b16 %v75
    %v508 = vunpack.c.l.b16 %v76
    %v509 = vunpack.c.h.b16 %v76
    %v510 = vunpack.c.l.b16 %v77
    %v511 = vunpack.c.h.b16 %v77
    %v512 = vunpack.c.l.b16 %v78
    %v513 = vunpack.c.h.b16 %v78
    %v514 = vunpack.c.l.b16 %v79
    %v515 = vunpack.c.h.b16 %v79
    %v516 = vunpack.c.l.b16 %v80
    %v517 = vunpack.c.h.b16 %v80
    %v518 = vunpack.c.l.b16 %v81
    %v519 = vunpack.c.h.b16 %v81
    %v520 = vunpack.c.l.b16 %v82
    %v521 = vunpack.c.h.b16 %v82
    %v522 = vunpack.c.l.b16 %v83
    %v523 = vunpack.c.h.b16 %v83
    %v524 = vunpack.c.l.b16 %v84
    %v525 = vunpack.c.h.b16 %v84
    %v526 = vunpack.c.l.b16 %v85
    %v527 = vunpack.c.h.b16 %v85
    %v528 = vunpack.c.l.b16 %v86
    %v529 = vunpack.c.h.b16 %v86
    %v530 = vunpack.c.l.b16 %v87
    %v531 = vunpack.c.h.b16 %v87
    %v532 = vunpack.c.l.b16 %v88
    %v533 = vunpack.c.h.b16 %v88
    %v534 = vunpack.c.l.b16 %v89
    %v535 = vunpack.c.h.b16 %v89
    %v536 = vunpack.c.l.b16 %v90
    %v537 = vunpack.c.h.b16 %v90
    %v538 = vunpack.c.l.b16 %v91
    %v539 = vunpack.c.h.b16 %v91
    %v540 = vunpack.c.l.b16 %v92
    %v541 = vunpack.c.h.b16 %v92
    %v542 = vunpack.c.l.b16 %v93
    %v543 = vunpack.c.h.b16 %v93
    %v544 = vunpack.c.l.b16 %v94
    %v545 = vunpack.c.h.b16 %v94
    %v546 = vunpack.c.l.b16 %v95
    %v547 = vunpack.c.h.b16 %v95
    %v548 = vunpack.c.l.b16 %v96
    %v549 = vunpack.c.h.b16 %v96
    %v550 = vunpack.c.l.b16 %v97
    %v551 = vunpack.c.h.b16 %v97
    %v552 = vunpack.c.l.b16 %v98
    %v553 = vunpack.c.h.b16 %v98
    %v554 = vunpack.c.l.b16 %v99
    %v555 = vunpack.c.h.b16 %v99
    %v556 = vunpack.c.l.b16 %v100
    %v557 = vunpack.c.h.b16 %v100
    %v558 = vunpack.c.l.b16 %v101
    %v559 = vunpack.c.h.b16 %v101
    %v560 = vunpack.c.l.b16 %v102
    %v561 = vunpack.c.h.b16 %v102
    %v562 = vunpack.c.l.b16 %v103
    %v563 = vunpack.c.h.b16 %v103
    %v564 = vunpack.c.l.b16 %v104
    %v565 = vunpack.c.h.b16 %v104
    %v566 = vunpack.c.l.b16 %v105
    %v567 = vunpack.c.h.b16 %v105
    %v568 = vunpack.c.l.b16 %v106
    %v569 = vunpack.c.h.b16 %v106
    %v570 = vunpack.c.l.b16 %v107
    %v571 = vunpack.c.h.b16 %v107
    %v572 = vunpack.c.l.b16 %v108
    %v573 = vunpack.c.h.b16 %v108
    %v574 = vunpack.c.l.b16 %v109
    %v575 = vunpack.c.h.b16 %v109
    %v576 = vunpack.c.l.b16 %v110
    %v577 = vunpack.c.h.b16 %v110
    %v578 = vunpack.c.l.b16 %v111
    %v579 = vunpack.c.h.b16 %v111
    %v580 = vunpack.c.l.b16 %v112
    %v581 = vunpack.c.h.b16 %v112
    %v582 = vunpack.c.l.b16 %v113
    %v583 = vunpack.c.h.b16 %v113
    %v584 = vunpack.c.l.b16 %v114
    %v585 = vunpack.c.h.b16 %v114
    %v586 = vunpack.c.l.b16 %v115
    %v587 = vunpack.c.h.b16 %v115
    %v588 = vunpack.c.l.b16 %v116
    %v589 = vunpack.c.h.b16 %v116
    %v590 = vunpack.c.l.b16 %v117
    %v591 = vunpack.c.h.b16 %v117
    %v592 = vunpack.c.l.b16 %v118
    %v593 = vunpack.c.h.b16 %v118
    %v594 = vunpack.c.l.b16 %v119
    %v595 = vunpack.c.h.b16 %v119
    %v596 = vunpack.c.l.b16 %v120
    %v597 = vunpack.c.h.b16 %v120
    %v598 = vunpack.c.l.b16 %v121
    %v599 = vunpack.c.h.b16 %v121
    %v600 = vunpack.c.l.b16 %v122
    %v601 = vunpack.c.h.b16 %v122
    %v602 = vunpack.c.l.b16 %v123
    %v603 = vunpack.c.h.b16 %v123
    %v604 = vunpack.c.l.b16 %v124
    %v605 = vunpack.c.h.b16 %v124
    %v606 = vunpack.c.l.b16 %v125
    %v607 = vunpack.c.h.b16 %v125
    %v608 = vunpack.c.l.b16 %v126
    %v609 = vunpack.c.h.b16 %v126
    %v610 = vunpack.c.l.b16 %v127
    %v611 = vunpack.c.h.b16 %v127
    %v612 = vunpack.c.l.b16 %v128
    %v613 = vunpack.c.h.b16 %v128
    %v614 = vunpack.c.l.b16 %v129
    %v615 = vunpack.c.h.b16 %v129
    %v616 = vunpack.c.l.b16 %v130
    %v617 = vunpack.c.h.b16 %v130
    %v618 = vunpack.c.l.b16 %v131
    %v619 = vunpack.c.h.b16 %v131
    %v620 = vunpack.c.l.b16 %v132
    %v621 = vunpack.c.h.b16 %v132
    %v622 = vunpack.c.l.b16 %v133
    %v623 = vunpack.c.h.b16 %v133
    %v624 = vunpack.c.l.b16 %v134
    %v625 = vunpack.c.h.b16 %v134
    %v626 = vunpack.c.l.b16 %v135
    %v627 = vunpack.c.h.b16 %v135
    %v628 = vunpack.c.l.b16 %v136
    %v629 = vunpack.c.h.b16 %v136
    %v630 = vunpack.c.l.b16 %v137
    %v631 = vunpack.c.h.b16 %v137
    %v632 = vunpack.c.l.b16 %v138
    %v633 = vunpack.c.h.b16 %v138
    %v634 = vunpack.c.l.b16 %v139
    %v635 = vunpack.c.h.b16 %v139
    %v636 = vunpack.c.l.b16 %v140
    %v637 = vunpack.c.h.b16 %v140
    %v638 = vunpack.c.l.b16 %v141
    %v639 = vunpack.c.h.b16 %v141
    %v640 = vunpack.c.l.b16 %v142
    %v641 = vunpack.c.h.b16 %v142
    %v642 = vunpack.c.l.b16 %v143
    %v643 = vunpack.c.h.b16 %v143
    %v644 = vunpack.c.l.b16 %v144
    %v645 = vunpack.c.h.b16 %v144
    %v646 = vunpack.c.l.b16 %v145
    %v647 = vunpack.c.h.b16 %v145
    %v648 = vunpack.c.l.b16 %v146
    %v649 = vunpack.c.h.b16 %v146
    %v650 = vunpack.c.l.b16 %v147
    %v651 = vunpack.c.h.b16 %v147
    %v652 = vunpack.c.l.b16 %v148
    %v653 = vunpack.c.h.b16 %v148
    %v654 = vunpack.c.l.b16 %v149
    %v655 = vunpack.c.h.b16 %v149
    %v656 = vunpack.c.l.b16 %v150
    %v657 = vunpack.c.h.b16 %v150
    %v658 = vunpack.c.l.b16 %v151
    %v659 = vunpack.c.h.b16 %v151
    %v660 = vunpack.c.l.b16 %v152
    %v661 = vunpack.c.h.b16 %v152
    %v662 = vunpack.c.l.b16 %v153
    %v663 = vunpack.c.h.b16 %v153
    %v664 = vunpack.c.l.b16 %v154
    %v665 = vunpack.c.h.b16 %v154
    %v666 = vunpack.c.l.b16 %v155
    %v667 = vunpack.c.h.b16 %v155
    %v668 = vunpack.c.l.b16 %v156
    %v669 = vunpack.c.h.b16 %v156
    %v670 = vunpack.c.l.b16 %v157
    %v671 = vunpack.c.h.b16 %v157
    %v672 = vunpack.c.l.b16 %v158
    %v673 = vunpack.c.h.b16 %v158
    %v674 = vunpack.c.l.b16 %v159
    %v675 = vunpack.c.h.b16 %v159
    %v676 = vunpack.c.l.b16 %v160
    %v677 = vunpack.c.h.b16 %v160
    %v678 = vunpack.c.l.b16 %v161
    %v679 = vunpack.c.h.b16 %v161
    %v680 = vunpack.c.l.b16 %v162
    %v681 = vunpack.c.h.b16 %v162
    %v682 = vunpack.c.l.b16 %v163
    %v683 = vunpack.c.h.b16 %v163
    %v684 = vunpack.c.l.b16 %v164
    %v685 = vunpack.c.h.b16 %v164
    %v686 = vunpack.c.l.b16 %v165
    %v687 = vunpack.c.h.b16 %v165
    %v688 = vunpack.c.l.b16 %v166
    %v689 = vunpack.c.h.b16 %v166
    %v690 = vunpack.c.l.b16 %v167
    %v691 = vunpack.c.h.b16 %v167
    %v692 = vunpack.c.l.b16 %v168
    %v693 = vunpack.c.h.b16 %v168
    %v694 = vunpack.c.l.b16 %v169
    %v695 = vunpack.c.h.b16 %v169
    %v696 = vunpack.c.l.b16 %v170
    %v697 = vunpack.c.h.b16 %v170
    %v698 = vunpack.c.l.b16 %v171
    %v699 = vunpack.c.h.b16 %v171
    %v700 = vunpack.c.l.b16 %v172
    %v701 = vunpack.c.h.b16 %v172
    %v702 = vunpack.c.l.b16 %v173
    %v703 = vunpack.c.h.b16 %v173
    %v704 = vunpack.c.l.b16 %v174
    %v705 = vunpack.c.h.b16 %v174
    %v706 = vunpack.c.l.b16 %v175
    %v707 = vunpack.c.h.b16 %v175
    %v708 = vunpack.c.l.b16 %v176
    %v709 = vunpack.c.h.b16 %v176
    %v710 = vunpack.c.l.b16 %v177
    %v711 = vunpack.c.h.b16 %v177
    %v712 = vunpack.c.l.b16 %v178
    %v713 = vunpack.c.h.b16 %v178
    %v714 = vunpack.c.l.b16 %v179
    %v715 = vunpack.c.h.b16 %v179
    %v716 = vunpack.c.l.b16 %v180
    %v717 = vunpack.c.h.b16 %v180
    %v718 = vunpack.c.l.b16 %v181
    %v719 = vunpack.c.h.b16 %v181
    %v720 = vunpack.c.l.b16 %v182
    %v721 = vunpack.c.h.b16 %v182
    %v722 = vunpack.c.l.b16 %v183
    %v723 = vunpack.c.h.b16 %v183
    %v724 = vunpack.c.l.b16 %v184
    %v725 = vunpack.c.h.b16 %v184
    %v726 = vunpack.c.l.b16 %v185
    %v727 = vunpack.c.h.b16 %v185
    %v728 = vunpack.c.l.b16 %v186
    %v729 = vunpack.c.h.b16 %v186
    %v730 = vunpack.c.l.b16 %v187
    %v731 = vunpack.c.h.b16 %v187
    %v732 = vunpack.c.l.b16 %v188
    %v733 = vunpack.c.h.b16 %v188
    %v734 = vunpack.c.l.b16 %v189
    %v735 = vunpack.c.h.b16 %v189
    %v736 = vunpack.c.l.b16 %v190
    %v737 = vunpack.c.h.b16 %v190
    %v738 = vunpack.c.l.b16 %v191
    %v739 = vunpack.c.h.b16 %v191
    %v740 = vunpack.c.l.b16 %v192
    %v741 = vunpack.c.h.b16 %v192
    %v742 = vunpack.c.l.b16 %v193
    %v743 = vunpack.c.h.b16 %v193
    %v744 = vunpack.c.l.b16 %v194
    %v745 = vunpack.c.h.b16 %v194
    %v746 = vunpack.c.l.b16 %v195
    %v747 = vunpack.c.h.b16 %v195
    %v748 = vunpack.c.l.b16 %v196
    %v749 = vunpack.c.h.b16 %v196
    %v750 = vunpack.c.l.b16 %v197
    %v751 = vunpack.c.h.b16 %v197
    %v752 = vunpack.c.l.b16 %v198
    %v753 = vunpack.c.h.b16 %v198
    %v754 = vunpack.c.l.b16 %v199
    %v755 = vunpack.c.h.b16 %v199
    %v756 = vunpack.c.l.b16 %v200
    %v757 = vunpack.c.h.b16 %v200
    %v758 = vunpack.c.l.b16 %v201
    %v759 = vunpack.c.h.b16 %v201
    %v760 = vunpack.c.l.b16 %v202
    %v761 = vunpack.c.h.b16 %v202
    %v762 = vunpack.c.l.b16 %v203
    %v763 = vunpack.c.h.b16 %v203
    %v764 = vunpack.c.l.b16 %v204
    %v765 = vunpack.c.h.b16 %v204
    %v766 = vunpack.c.l.b16 %v205
    %v767 = vunpack.c.h.b16 %v205
    %v768 = vunpack.c.l.b16 %v206
    %v769 = vunpack.c.h.b16 %v206
    %v770 = vunpack.c.l.b16 %v207
    %v771 = vunpack.c.h.b16 %v207
    %v772 = vunpack.c.l.b16 %v208
    %v773 = vunpack.c.h.b16 %v208
    %v774 = vunpack.c.l.b16 %v209
    %v775 = vunpack.c.h.b16 %v209
    %v776 = vunpack.c.l.b16 %v210
    %v777 = vunpack.c.h.b16 %v210
    %v778 = vunpack.c.l.b16 %v211
    %v779 = vunpack.c.h.b16 %v211
    %v780 = vunpack.c.l.b16 %v212
    %v781 = vunpack.c.h.b16 %v212
    %v782 = vunpack.c.l.b16 %v213
    %v783 = vunpack.c.h.b16 %v213
    %v784 = vunpack.c.l.b16 %v214
    %v785 = vunpack.c.h.b16 %v214
    %v786 = vunpack.c.l.b16 %v215
    %v787 = vunpack.c.h.b16 %v215
    %v788 = vunpack.c.l.b16 %v216
    %v789 = vunpack.c.h.b16 %v216
    %v790 = vunpack.c.l.b16 %v217
    %v791 = vunpack.c.h.b16 %v217
    %v792 = vunpack.c.l.b16 %v218
    %v793 = vunpack.c.h.b16 %v218
    %v794 = vunpack.c.l.b16 %v219
    %v795 = vunpack.c.h.b16 %v219
    %v796 = vunpack.c.l.b16 %v220
    %v797 = vunpack.c.h.b16 %v220
    %v798 = vunpack.c.l.b16 %v221
    %v799 = vunpack.c.h.b16 %v221
    %v800 = vunpack.c.l.b16 %v222
    %v801 = vunpack.c.h.b16 %v222
    %v802 = vunpack.c.l.b16 %v223
    %v803 = vunpack.c.h.b16 %v223
    %v804 = vunpack.c.l.b16 %v224
    %v805 = vunpack.c.h.b16 %v224
    %v806 = vunpack.c.l.b16 %v225
    %v807 = vunpack.c.h.b16 %v225
    %v808 = vunpack.c.l.b16 %v226
    %v809 = vunpack.c.h.b16 %v226
    %v810 = vunpack.c.l.b16 %v227
    %v811 = vunpack.c.h.b16 %v227
    %v812 = vunpack.c.l.b16 %v228
    %v813 = vunpack.c.h.b16 %v228
    %v814 = vunpack.c.l.b16 %v229
    %v815 = vunpack.c.h.b16 %v229
    %v816 = vunpack.c.l.b16 %v230
    %v817 = vunpack.c.h.b16 %v230
    %v818 = vunpack.c.l.b16 %v231
    %v819 = vunpack.c.h.b16 %v231
    %v820 = vunpack.c.l.b16 %v232
    %v821 = vunpack.c.h.b16 %v232
    %v822 = vunpack.c.l.b16 %v233
    %v823 = vunpack.c.h.b16 %v233
    %v824 = vunpack.c.l.b16 %v234
    %v825 = vunpack.c.h.b16 %v234
    %v826 = vunpack.c.l.b16 %v235
    %v827 = vunpack.c.h.b16 %v235
    %v828 = vunpack.c.l.b16 %v236
    %v829 = vunpack.c.h.b16 %v236
    %v830 = vunpack.c.l.b16 %v237
    %v831 = vunpack.c.h.b16 %v237
    %v832 = vunpack.c.l.b16 %v238
    %v833 = vunpack.c.h.b16 %v238
    %v834 = vunpack.c.l.b16 %v239
    %v835 = vunpack.c.h.b16 %v239
    %v836 = vunpack.c.l.b16 %v240
    %v837 = vunpack.c.h.b16 %v240
    %v838 = vunpack.c.l.b16 %v241
    %v839 = vunpack.c.h.b16 %v241
    %v840 = vunpack.c.l.b16 %v242
    %v841 = vunpack.c.h.b16 %v242
    %v842 = vunpack.c.l.b16 %v243
    %v843 = vunpack.c.h.b16 %v243
    %v844 = vunpack.c.l.b16 %v244
    %v845 = vunpack.c.h.b16 %v244
    %v846 = vunpack.c.l.b16 %v245
    %v847 = vunpack.c.h.b16 %v245
    %v848 = vunpack.c.l.b16 %v246
    %v849 = vunpack.c.h.b16 %v246
    %v850 = vunpack.c.l.b16 %v247
    %v851 = vunpack.c.h.b16 %v247
    %v852 = vunpack.c.l.b16 %v248
    %v853 = vunpack.c.h.b16 %v248
    %v854 = vunpack.c.l.b16 %v249
    %v855 = vunpack.c.h.b16 %v249
    %v856 = vunpack.c.l.b16 %v250
    %v857 = vunpack.c.h.b16 %v250
    %v858 = vunpack.c.l.b16 %v251
    %v859 = vunpack.c.h.b16 %v251
    %v860 = vunpack.c.l.b16 %v252
    %v861 = vunpack.c.h.b16 %v252
    %v862 = vunpack.c.l.b16 %v253
    %v863 = vunpack.c.h.b16 %v253
    %v864 = vpack.c.b16 %v476, %v472
    %v865 = vpack.c.b16 %v477, %v473
    %v866 = vpack.c.b16 %v478, %v474
    %v867 = vpack.c.b16 %v479, %v475
    %v868 = vpack.c.b16 %v484, %v480
    %v869 = vpack.c.b16 %v485, %v481
    %v870 = vpack.c.b16 %v486, %v482
    %v871 = vpack.c.b16 %v487, %v483
    %v872 = vpack.c.b16 %v492, %v488
    %v873 = vpack.c.b16 %v493, %v489
    %v874 = vpack.c.b16 %v494, %v490
    %v875 = vpack.c.b16 %v495, %v491
    %v876 = vpack.c.b16 %v500, %v496
    %v877 = vpack.c.b16 %v501, %v497
    %v878 = vpack.c.b16 %v502, %v498
    %v879 = vpack.c.b16 %v503, %v499
    %v880 = vpack.c.b16 %v508, %v504
    %v881 = vpack.c.b16 %v509, %v505
    %v882 = vpack.c.b16 %v510, %v506
    %v883 = vpack.c.b16 %v511, %v507
    %v884 = vpack.c.b16 %v516, %v512
    %v885 = vpack.c.b16 %v517, %v513
    %v886 = vpack.c.b16 %v518, %v514
    %v887 = vpack.c.b16 %v519, %v515
    %v888 = vpack.c.b16 %v524, %v520
    %v889 = vpack.c.b16 %v525, %v521
    %v890 = vpack.c.b16 %v526, %v522
    %v891 = vpack.c.b16 %v527, %v523
    %v892 = vpack.c.b16 %v532, %v528
    %v893 = vpack.c.b16 %v533, %v529
    %v894 = vpack.c.b16 %v534, %v530
    %v895 = vpack.c.b16 %v535, %v531
    %v896 = vpack.c.b16 %v540, %v536
    %v897 = vpack.c.b16 %v541, %v537
    %v898 = vpack.c.b16 %v542, %v538
    %v899 = vpack.c.b16 %v543, %v539
    %v900 = vpack.c.b16 %v548, %v544
    %v901 = vpack.c.b16 %v549, %v545
    %v902 = vpack.c.b16 %v550, %v546
    %v903 = vpack.c.b16 %v551, %v547
    %v904 = vpack.c.b16 %v556, %v552
    %v905 = vpack.c.b16 %v557, %v553
    %v906 = vpack.c.b16 %v558, %v554
    %v907 = vpack.c.b16 %v559, %v555
    %v908 = vpack.c.b16 %v564, %v560
    %v909 = vpack.c.b16 %v565, %v561
    %v910 = vpack.c.b16 %v566, %v562
    %v911 = vpack.c.b16 %v567, %v563
    %v912 = vpack.c.b16 %v572, %v568
    %v913 = vpack.c.b16 %v573, %v569
    %v914 = vpack.c.b16 %v574, %v570
    %v915 = vpack.c.b16 %v575, %v571
    %v916 = vpack.c.b16 %v580, %v576
    %v917 = vpack.c.b16 %v581, %v577
    %v918 = vpack.c.b16 %v582, %v578
    %v919 = vpack.c.b16 %v583, %v579
    %v920 = vpack.c.b16 %v588, %v584
    %v921 = vpack.c.b16 %v589, %v585
    %v922 = vpack.c.b16 %v590, %v586
    %v923 = vpack.c.b16 %v591, %v587
    %v924 = vpack.c.b16 %v596, %v592
    %v925 = vpack.c.b16 %v597, %v593
    %v926 = vpack.c.b16 %v598, %v594
    %v927 = vpack.c.b16 %v599, %v595
    %v928 = vpack.c.b16 %v604, %v600
    %v929 = vpack.c.b16 %v605, %v601
    %v930 = vpack.c.b16 %v606, %v602
    %v931 = vpack.c.b16 %v607, %v603
    %v932 = vpack.c.b16 %v612, %v608
    %v933 = vpack.c.b16 %v613, %v609
    %v934 = vpack.c.b16 %v614, %v610
    %v935 = vpack.c.b16 %v615, %v611
    %v936 = vpack.c.b16 %v620, %v616
    %v937 = vpack.c.b16 %v621, %v617
    %v938 = vpack.c.b16 %v622, %v618
    %v939 = vpack.c.b16 %v623, %v619
    %v940 = vpack.c.b16 %v628, %v624
    %v941 = vpack.c.b16 %v629, %v625
    %v942 = vpack.c.b16 %v630, %v626
    %v943 = vpack.c.b16 %v631, %v627
    %v944 = vpack.c.b16 %v636, %v632
    %v945 = vpack.c.b16 %v637, %v633
    %v946 = vpack.c.b16 %v638, %v634
    %v947 = vpack.c.b16 %v639, %v635
    %v948 = vpack.c.b16 %v644, %v640
    %v949 = vpack.c.b16 %v645, %v641
    %v950 = vpack.c.b16 %v646, %v642
    %v951 = vpack.c.b16 %v647, %v643
    %v952 = vpack.c.b16 %v652, %v648
    %v953 = vpack.c.b16 %v653, %v649
    %v954 = vpack.c.b16 %v654, %v650
    %v955 = vpack.c.b16 %v655, %v651
    %v956 = vpack.c.b16 %v660, %v656
    %v957 = vpack.c.b16 %v661, %v657
    %v958 = vpack.c.b16 %v662, %v658
    %v959 = vpack.c.b16 %v663, %v659
    %v960 = vpack.c.b16 %v668, %v664
    %v961 = vpack.c.b16 %v669, %v665
    %v962 = vpack.c.b16 %v670, %v666
    %v963 = vpack.c.b16 %v671, %v667
    %v964 = vpack.c.b16 %v676, %v672
    %v965 = vpack.c.b16 %v677, %v673
    %v966 = vpack.c.b16 %v678, %v674
    %v967 = vpack.c.b16 %v679, %v675
    %v968 = vpack.c.b16 %v684, %v680
    %v969 = vpack.c.b16 %v685, %v681
    %v970 = vpack.c.b16 %v686, %v682
    %v971 = vpack.c.b16 %v687, %v683
    %v972 = vpack.c.b16 %v692, %v688
    %v973 = vpack.c.b16 %v693, %v689
    %v974 = vpack.c.b16 %v694, %v690
    %v975 = vpack.c.b16 %v695, %v691
    %v976 = vpack.c.b16 %v700, %v696
    %v977 = vpack.c.b16 %v701, %v697
    %v978 = vpack.c.b16 %v702, %v698
    %v979 = vpack.c.b16 %v703, %v699
    %v980 = vpack.c.b16 %v708, %v704
    %v981 = vpack.c.b16 %v709, %v705
    %v982 = vpack.c.b16 %v710, %v706
    %v983 = vpack.c.b16 %v711, %v707
    %v984 = vpack.c.b16 %v716, %v712
    %v985 = vpack.c.b16 %v717, %v713
    %v986 = vpack.c.b16 %v718, %v714
    %v987 = vpack.c.b16 %v719, %v715
    %v988 = vpack.c.b16 %v724, %v720
    %v989 = vpack.c.b16 %v725, %v721
    %v990 = vpack.c.b16 %v726, %v722
    %v991 = vpack.c.b16 %v727, %v723
    %v992 = vpack.c.b16 %v732, %v728
    %v993 = vpack.c.b16 %v733, %v729
    %v994 = vpack.c.b16 %v734, %v730
    %v995 = vpack.c.b16 %v735, %v731
    %v996 = vpack.c.b16 %v740, %v736
    %v997 = vpack.c.b16 %v741, %v737
    %v998 = vpack.c.b16 %v742, %v738
    %v999 = vpack.c.b16 %v743, %v739
    %v1000 = vpack.c.b16 %v748, %v744
    %v1001 = vpack.c.b16 %v749, %v745
    %v1002 = vpack.c.b16 %v750, %v746
    %v1003 = vpack.c.b16 %v751, %v747
    %v1004 = vpack.c.b16 %v756, %v752
    %v1005 = vpack.c.b16 %v757, %v753
    %v1006 = vpack.c.b16 %v758, %v754
    %v1007 = vpack.c.b16 %v759, %v755
    %v1008 = vpack.c.b16 %v764, %v760
    %v1009 = vpack.c.b16 %v765, %v761
    %v1010 = vpack.c.b16 %v766, %v762
    %v1011 = vpack.c.b16 %v767, %v763
    %v1012 = vpack.c.b16 %v772, %v768
    %v1013 = vpack.c.b16 %v773, %v769
    %v1014 = vpack.c.b16 %v774, %v770
    %v1015 = vpack.c.b16 %v775, %v771
    %v1016 = vpack.c.b16 %v780, %v776
    %v1017 = vpack.c.b16 %v781, %v777
    %v1018 = vpack.c.b16 %v782, %v778
    %v1019 = vpack.c.b16 %v783, %v779
    %v1020 = vpack.c.b16 %v788, %v784
    %v1021 = vpack.c.b16 %v789, %v785
    %v1022 = vpack.c.b16 %v790, %v786
    %v1023 = vpack.c.b16 %v791, %v787
    %v1024 = vpack.c.b16 %v796, %v792
    %v1025 = vpack.c.b16 %v797, %v793
    %v1026 = vpack.c.b16 %v798, %v794
    %v1027 = vpack.c.b16 %v799, %v795
    %v1028 = vpack.c.b16 %v804, %v800
    %v1029 = vpack.c.b16 %v805, %v801
    %v1030 = vpack.c.b16 %v806, %v802
    %v1031 = vpack.c.b16 %v807, %v803
    %v1032 = vpack.c.b16 %v812, %v808
    %v1033 = vpack.c.b16 %v813, %v809
    %v1034 = vpack.c.b16 %v814, %v810
    %v1035 = vpack.c.b16 %v815, %v811
    %v1036 = vpack.c.b16 %v820, %v816
    %v1037 = vpack.c.b16 %v821, %v817
    %v1038 = vpack.c.b16 %v822, %v818
    %v1039 = vpack.c.b16 %v823, %v819
    %v1040 = vpack.c.b16 %v828, %v824
    %v1041 = vpack.c.b16 %v829, %v825
    %v1042 = vpack.c.b16 %v830, %v826
    %v1043 = vpack.c.b16 %v831, %v827
    %v1044 = vpack.c.b16 %v836, %v832
    %v1045 = vpack.c.b16 %v837, %v833
    %v1046 = vpack.c.b16 %v838, %v834
    %v1047 = vpack.c.b16 %v839, %v835
    %v1048 = vpack.c.b16 %v844, %v840
    %v1049 = vpack.c.b16 %v845, %v841
    %v1050 = vpack.c.b16 %v846, %v842
    %v1051 = vpack.c.b16 %v847, %v843
    %v1052 = vpack.c.b16 %v852, %v848
    %v1053 = vpack.c.b16 %v853, %v849
    %v1054 = vpack.c.b16 %v854, %v850
    %v1055 = vpack.c.b16 %v855, %v851
    %v1056 = vpack.c.b16 %v860, %v856
    %v1057 = vpack.c.b16 %v861, %v857
    %v1058 = vpack.c.b16 %v862, %v858
    %v1059 = vpack.c.b16 %v863, %v859
    %vm1256 = vcmask 130048
    %v1258 = vsel %vm1256, %v57, 0
    %1260 = vmatprep.subr.bf16.mxu0 %v865
    %1261 = vmatpush1.bf16.msra.mxu0 %v864
    %1262 = vmatprep.subr.bf16.mxu0 %v869
    %1263 = vmatpush1.bf16.msra.mxu0 %v868
    %1264 = vmatprep.subr.bf16.mxu0 %v873
    %1265 = vmatpush1.bf16.msra.mxu0 %v872
    %1266 = vmatprep.subr.bf16.mxu0 %v877
    %1267 = vmatpush1.bf16.msra.mxu0 %v876
    %1268 = vmatprep.subr.bf16.mxu0 %v881
    %1269 = vmatpush1.bf16.msra.mxu0 %v880
    %1270 = vmatprep.subr.bf16.mxu0 %v885
    %1271 = vmatpush1.bf16.msra.mxu0 %v884
    %1272 = vmatprep.subr.bf16.mxu0 %v889
    %1273 = vmatpush1.bf16.msra.mxu0 %v888
    %1274 = vmatprep.subr.bf16.mxu0 %v893
    %1275 = vmatpush1.bf16.msra.mxu0 %v892
    %1276 = vmatprep.subr.bf16.mxu0 %v897
    %1277 = vmatpush1.bf16.msra.mxu0 %v896
    %1278 = vmatprep.subr.bf16.mxu0 %v901
    %1279 = vmatpush1.bf16.msra.mxu0 %v900
    %1280 = vmatprep.subr.bf16.mxu0 %v905
    %1281 = vmatpush1.bf16.msra.mxu0 %v904
    %1282 = vmatprep.subr.bf16.mxu0 %v909
    %1283 = vmatpush1.bf16.msra.mxu0 %v908
    %1284 = vmatprep.subr.bf16.mxu0 %v913
    %1285 = vmatpush1.bf16.msra.mxu0 %v912
    %1286 = vmatprep.subr.bf16.mxu0 %v917
    %1287 = vmatpush1.bf16.msra.mxu0 %v916
    %1288 = vmatprep.subr.bf16.mxu0 %v921
    %1289 = vmatpush1.bf16.msra.mxu0 %v920
    %1290 = vmatprep.subr.bf16.mxu0 %v925
    %1291 = vmatpush1.bf16.msra.mxu0 %v924
    %1292 = vmatprep.mubr.bf16.mxu0 %v52
    %1293 = vmatmul.mubr.bf16.gmra.mrb[0].mxu0 %v51
    %v1294 = vpop.f32.mrb[0].mxu0
    %v1295 = vadd.f32 %v259, %v1294
    %v1296 = vpop.f32.mrb[0].mxu0
    %v1297 = vadd.f32 %v263, %v1296
    %v1298 = vpop.f32.mrb[0].mxu0
    %v1299 = vadd.f32 %v259, %v1298
    %v1300 = vpop.f32.mrb[0].mxu0
    %v1301 = vadd.f32 %v263, %v1300
    %1302 = vdwg.mxu0
    %1303 = vmatprep.subr.bf16.mxu0 %v929
    %1304 = vmatpush1.bf16.msra.mxu0 %v928
    %1305 = vmatprep.subr.bf16.mxu0 %v933
    %1306 = vmatpush1.bf16.msra.mxu0 %v932
    %1307 = vmatprep.subr.bf16.mxu0 %v937
    %1308 = vmatpush1.bf16.msra.mxu0 %v936
    %1309 = vmatprep.subr.bf16.mxu0 %v941
    %1310 = vmatpush1.bf16.msra.mxu0 %v940
    %1311 = vmatprep.subr.bf16.mxu0 %v945
    %1312 = vmatpush1.bf16.msra.mxu0 %v944
    %1313 = vmatprep.subr.bf16.mxu0 %v949
    %1314 = vmatpush1.bf16.msra.mxu0 %v948
    %1315 = vmatprep.subr.bf16.mxu0 %v953
    %1316 = vmatpush1.bf16.msra.mxu0 %v952
    %1317 = vmatprep.subr.bf16.mxu0 %v957
    %1318 = vmatpush1.bf16.msra.mxu0 %v956
    %1319 = vmatprep.subr.bf16.mxu0 %v961
    %1320 = vmatpush1.bf16.msra.mxu0 %v960
    %1321 = vmatprep.subr.bf16.mxu0 %v965
    %1322 = vmatpush1.bf16.msra.mxu0 %v964
    %1323 = vmatprep.subr.bf16.mxu0 %v969
    %1324 = vmatpush1.bf16.msra.mxu0 %v968
    %1325 = vmatprep.subr.bf16.mxu0 %v973
    %1326 = vmatpush1.bf16.msra.mxu0 %v972
    %1327 = vmatprep.subr.bf16.mxu0 %v977
    %1328 = vmatpush1.bf16.msra.mxu0 %v976
    %1329 = vmatprep.subr.bf16.mxu0 %v981
    %1330 = vmatpush1.bf16.msra.mxu0 %v980
    %1331 = vmatprep.subr.bf16.mxu0 %v985
    %1332 = vmatpush1.bf16.msra.mxu0 %v984
    %1333 = vmatprep.subr.bf16.mxu0 %v989
    %1334 = vmatpush1.bf16.msra.mxu0 %v988
    %1335 = vmatprep.mubr.bf16.mxu0 %v54
    %1336 = vmatmul.mubr.bf16.gmra.mrb[0].mxu0 %v53
    %v1337 = vpop.f32.mrb[0].mxu0
    %v1338 = vadd.f32 %v1295, %v1337
    %v1339 = vpop.f32.mrb[0].mxu0
    %v1340 = vadd.f32 %v1297, %v1339
    %v1341 = vpop.f32.mrb[0].mxu0
    %v1342 = vadd.f32 %v1299, %v1341
    %v1343 = vpop.f32.mrb[0].mxu0
    %v1344 = vadd.f32 %v1301, %v1343
    %1345 = vdwg.mxu0
    %1346 = vmatprep.subr.bf16.mxu0 %v993
    %1347 = vmatpush1.bf16.msra.mxu0 %v992
    %1348 = vmatprep.subr.bf16.mxu0 %v997
    %1349 = vmatpush1.bf16.msra.mxu0 %v996
    %1350 = vmatprep.subr.bf16.mxu0 %v1001
    %1351 = vmatpush1.bf16.msra.mxu0 %v1000
    %1352 = vmatprep.subr.bf16.mxu0 %v1005
    %1353 = vmatpush1.bf16.msra.mxu0 %v1004
    %1354 = vmatprep.subr.bf16.mxu0 %v1009
    %1355 = vmatpush1.bf16.msra.mxu0 %v1008
    %1356 = vmatprep.subr.bf16.mxu0 %v1013
    %1357 = vmatpush1.bf16.msra.mxu0 %v1012
    %1358 = vmatprep.subr.bf16.mxu0 %v1017
    %1359 = vmatpush1.bf16.msra.mxu0 %v1016
    %1360 = vmatprep.subr.bf16.mxu0 %v1021
    %1361 = vmatpush1.bf16.msra.mxu0 %v1020
    %1362 = vmatprep.subr.bf16.mxu0 %v1025
    %1363 = vmatpush1.bf16.msra.mxu0 %v1024
    %1364 = vmatprep.subr.bf16.mxu0 %v1029
    %1365 = vmatpush1.bf16.msra.mxu0 %v1028
    %1366 = vmatprep.subr.bf16.mxu0 %v1033
    %1367 = vmatpush1.bf16.msra.mxu0 %v1032
    %1368 = vmatprep.subr.bf16.mxu0 %v1037
    %1369 = vmatpush1.bf16.msra.mxu0 %v1036
    %1370 = vmatprep.subr.bf16.mxu0 %v1041
    %1371 = vmatpush1.bf16.msra.mxu0 %v1040
    %1372 = vmatprep.subr.bf16.mxu0 %v1045
    %1373 = vmatpush1.bf16.msra.mxu0 %v1044
    %1374 = vmatprep.subr.bf16.mxu0 %v1049
    %1375 = vmatpush1.bf16.msra.mxu0 %v1048
    %1376 = vmatprep.subr.bf16.mxu0 %v1053
    %1377 = vmatpush1.bf16.msra.mxu0 %v1052
    %1378 = vmatprep.mubr.bf16.mxu0 %v56
    %1379 = vmatmul.mubr.bf16.gmra.mrb[0].mxu0 %v55
    %v1380 = vpop.f32.mrb[0].mxu0
    %v1381 = vadd.f32 %v1338, %v1380
    %v1382 = vpop.f32.mrb[0].mxu0
    %v1383 = vadd.f32 %v1340, %v1382
    %v1384 = vpop.f32.mrb[0].mxu0
    %v1385 = vadd.f32 %v1342, %v1384
    %v1386 = vpop.f32.mrb[0].mxu0
    %v1387 = vadd.f32 %v1344, %v1386
    %1388 = vdwg.mxu0
    %1389 = vmatprep.subr.bf16.mxu0 %v1057
    %1390 = vmatpush1.bf16.msra.mxu0 %v1056
    %1391 = vmatprep.subr.bf16.mxu0 0
    %1392 = vmatpush1.bf16.msra.mxu0 0
    %1393 = vmatprep.subr.bf16.mxu0 0
    %1394 = vmatpush1.bf16.msra.mxu0 0
    %1395 = vmatprep.subr.bf16.mxu0 0
    %1396 = vmatpush1.bf16.msra.mxu0 0
    %1397 = vmatprep.subr.bf16.mxu0 0
    %1398 = vmatpush1.bf16.msra.mxu0 0
    %1399 = vmatprep.subr.bf16.mxu0 0
    %1400 = vmatpush1.bf16.msra.mxu0 0
    %1401 = vmatprep.subr.bf16.mxu0 0
    %1402 = vmatpush1.bf16.msra.mxu0 0
    %1403 = vmatprep.subr.bf16.mxu0 0
    %1404 = vmatpush1.bf16.msra.mxu0 0
    %1405 = vmatprep.subr.bf16.mxu0 0
    %1406 = vmatpush1.bf16.msra.mxu0 0
    %1407 = vmatprep.subr.bf16.mxu0 0
    %1408 = vmatpush1.bf16.msra.mxu0 0
    %1409 = vmatprep.subr.bf16.mxu0 0
    %1410 = vmatpush1.bf16.msra.mxu0 0
    %1411 = vmatprep.subr.bf16.mxu0 0
    %1412 = vmatpush1.bf16.msra.mxu0 0
    %1413 = vmatprep.subr.bf16.mxu0 0
    %1414 = vmatpush1.bf16.msra.mxu0 0
    %1415 = vmatprep.subr.bf16.mxu0 0
    %1416 = vmatpush1.bf16.msra.mxu0 0
    %1417 = vmatprep.subr.bf16.mxu0 0
    %1418 = vmatpush1.bf16.msra.mxu0 0
    %1419 = vmatprep.subr.bf16.mxu0 0
    %1420 = vmatpush1.bf16.msra.mxu0 0
    %1421 = vmatprep.mubr.bf16.mxu0 0
    %1422 = vmatmul.mubr.bf16.gmra.mrb[0].mxu0 %v1258
    %v1423 = vpop.f32.mrb[0].mxu0
    %v1424 = vadd.f32 %v1381, %v1423
    %v1425 = vpop.f32.mrb[0].mxu0
    %v1426 = vadd.f32 %v1383, %v1425
    %v1427 = vpop.f32.mrb[0].mxu0
    %v1428 = vadd.f32 %v1385, %v1427
    %v1429 = vpop.f32.mrb[0].mxu0
    %v1430 = vadd.f32 %v1387, %v1429
    %1431 = vdwg.mxu0
    %1432 = vmatprep.subr.bf16.mxu0 %v867
    %1433 = vmatpush1.bf16.msra.mxu0 %v866
    %1434 = vmatprep.subr.bf16.mxu0 %v871
    %1435 = vmatpush1.bf16.msra.mxu0 %v870
    %1436 = vmatprep.subr.bf16.mxu0 %v875
    %1437 = vmatpush1.bf16.msra.mxu0 %v874
    %1438 = vmatprep.subr.bf16.mxu0 %v879
    %1439 = vmatpush1.bf16.msra.mxu0 %v878
    %1440 = vmatprep.subr.bf16.mxu0 %v883
    %1441 = vmatpush1.bf16.msra.mxu0 %v882
    %1442 = vmatprep.subr.bf16.mxu0 %v887
    %1443 = vmatpush1.bf16.msra.mxu0 %v886
    %1444 = vmatprep.subr.bf16.mxu0 %v891
    %1445 = vmatpush1.bf16.msra.mxu0 %v890
    %1446 = vmatprep.subr.bf16.mxu0 %v895
    %1447 = vmatpush1.bf16.msra.mxu0 %v894
    %1448 = vmatprep.subr.bf16.mxu0 %v899
    %1449 = vmatpush1.bf16.msra.mxu0 %v898
    %1450 = vmatprep.subr.bf16.mxu0 %v903
    %1451 = vmatpush1.bf16.msra.mxu0 %v902
    %1452 = vmatprep.subr.bf16.mxu0 %v907
    %1453 = vmatpush1.bf16.msra.mxu0 %v906
    %1454 = vmatprep.subr.bf16.mxu0 %v911
    %1455 = vmatpush1.bf16.msra.mxu0 %v910
    %1456 = vmatprep.subr.bf16.mxu0 %v915
    %1457 = vmatpush1.bf16.msra.mxu0 %v914
    %1458 = vmatprep.subr.bf16.mxu0 %v919
    %1459 = vmatpush1.bf16.msra.mxu0 %v918
    %1460 = vmatprep.subr.bf16.mxu0 %v923
    %1461 = vmatpush1.bf16.msra.mxu0 %v922
    %1462 = vmatprep.subr.bf16.mxu0 %v927
    %1463 = vmatpush1.bf16.msra.mxu0 %v926
    %1464 = vmatprep.mubr.bf16.mxu0 %v52
    %1465 = vmatmul.mubr.bf16.gmra.mrb[0].mxu0 %v51
    %v1466 = vpop.f32.mrb[0].mxu0
    %v1467 = vadd.f32 %v267, %v1466
    %v1468 = vpop.f32.mrb[0].mxu0
    %v1469 = vadd.f32 %v271, %v1468
    %v1470 = vpop.f32.mrb[0].mxu0
    %v1471 = vadd.f32 %v267, %v1470
    %v1472 = vpop.f32.mrb[0].mxu0
    %v1473 = vadd.f32 %v271, %v1472
    %1474 = vdwg.mxu0
    %1475 = vmatprep.subr.bf16.mxu0 %v931
    %1476 = vmatpush1.bf16.msra.mxu0 %v930
    %1477 = vmatprep.subr.bf16.mxu0 %v935
    %1478 = vmatpush1.bf16.msra.mxu0 %v934
    %1479 = vmatprep.subr.bf16.mxu0 %v939
    %1480 = vmatpush1.bf16.msra.mxu0 %v938
    %1481 = vmatprep.subr.bf16.mxu0 %v943
    %1482 = vmatpush1.bf16.msra.mxu0 %v942
    %1483 = vmatprep.subr.bf16.mxu0 %v947
    %1484 = vmatpush1.bf16.msra.mxu0 %v946
    %1485 = vmatprep.subr.bf16.mxu0 %v951
    %1486 = vmatpush1.bf16.msra.mxu0 %v950
    %1487 = vmatprep.subr.bf16.mxu0 %v955
    %1488 = vmatpush1.bf16.msra.mxu0 %v954
    %1489 = vmatprep.subr.bf16.mxu0 %v959
    %1490 = vmatpush1.bf16.msra.mxu0 %v958
    %1491 = vmatprep.subr.bf16.mxu0 %v963
    %1492 = vmatpush1.bf16.msra.mxu0 %v962
    %1493 = vmatprep.subr.bf16.mxu0 %v967
    %1494 = vmatpush1.bf16.msra.mxu0 %v966
    %1495 = vmatprep.subr.bf16.mxu0 %v971
    %1496 = vmatpush1.bf16.msra.mxu0 %v970
    %1497 = vmatprep.subr.bf16.mxu0 %v975
    %1498 = vmatpush1.bf16.msra.mxu0 %v974
    %1499 = vmatprep.subr.bf16.mxu0 %v979
    %1500 = vmatpush1.bf16.msra.mxu0 %v978
    %1501 = vmatprep.subr.bf16.mxu0 %v983
    %1502 = vmatpush1.bf16.msra.mxu0 %v982
    %1503 = vmatprep.subr.bf16.mxu0 %v987
    %1504 = vmatpush1.bf16.msra.mxu0 %v986
    %1505 = vmatprep.subr.bf16.mxu0 %v991
    %1506 = vmatpush1.bf16.msra.mxu0 %v990
    %1507 = vmatprep.mubr.bf16.mxu0 %v54
    %1508 = vmatmul.mubr.bf16.gmra.mrb[0].mxu0 %v53
    %v1509 = vpop.f32.mrb[0].mxu0
    %v1510 = vadd.f32 %v1467, %v1509
    %v1511 = vpop.f32.mrb[0].mxu0
    %v1512 = vadd.f32 %v1469, %v1511
    %v1513 = vpop.f32.mrb[0].mxu0
    %v1514 = vadd.f32 %v1471, %v1513
    %v1515 = vpop.f32.mrb[0].mxu0
    %v1516 = vadd.f32 %v1473, %v1515
    %1517 = vdwg.mxu0
    %1518 = vmatprep.subr.bf16.mxu0 %v995
    %1519 = vmatpush1.bf16.msra.mxu0 %v994
    %1520 = vmatprep.subr.bf16.mxu0 %v999
    %1521 = vmatpush1.bf16.msra.mxu0 %v998
    %1522 = vmatprep.subr.bf16.mxu0 %v1003
    %1523 = vmatpush1.bf16.msra.mxu0 %v1002
    %1524 = vmatprep.subr.bf16.mxu0 %v1007
    %1525 = vmatpush1.bf16.msra.mxu0 %v1006
    %1526 = vmatprep.subr.bf16.mxu0 %v1011
    %1527 = vmatpush1.bf16.msra.mxu0 %v1010
    %1528 = vmatprep.subr.bf16.mxu0 %v1015
    %1529 = vmatpush1.bf16.msra.mxu0 %v1014
    %1530 = vmatprep.subr.bf16.mxu0 %v1019
    %1531 = vmatpush1.bf16.msra.mxu0 %v1018
    %1532 = vmatprep.subr.bf16.mxu0 %v1023
    %1533 = vmatpush1.bf16.msra.mxu0 %v1022
    %1534 = vmatprep.subr.bf16.mxu0 %v1027
    %1535 = vmatpush1.bf16.msra.mxu0 %v1026
    %1536 = vmatprep.subr.bf16.mxu0 %v1031
    %1537 = vmatpush1.bf16.msra.mxu0 %v1030
    %1538 = vmatprep.subr.bf16.mxu0 %v1035
    %1539 = vmatpush1.bf16.msra.mxu0 %v1034
    %1540 = vmatprep.subr.bf16.mxu0 %v1039
    %1541 = vmatpush1.bf16.msra.mxu0 %v1038
    %1542 = vmatprep.subr.bf16.mxu0 %v1043
    %1543 = vmatpush1.bf16.msra.mxu0 %v1042
    %1544 = vmatprep.subr.bf16.mxu0 %v1047
    %1545 = vmatpush1.bf16.msra.mxu0 %v1046
    %1546 = vmatprep.subr.bf16.mxu0 %v1051
    %1547 = vmatpush1.bf16.msra.mxu0 %v1050
    %1548 = vmatprep.subr.bf16.mxu0 %v1055
    %1549 = vmatpush1.bf16.msra.mxu0 %v1054
    %1550 = vmatprep.mubr.bf16.mxu0 %v56
    %1551 = vmatmul.mubr.bf16.gmra.mrb[0].mxu0 %v55
    %v1552 = vpop.f32.mrb[0].mxu0
    %v1553 = vadd.f32 %v1510, %v1552
    %v1554 = vpop.f32.mrb[0].mxu0
    %v1555 = vadd.f32 %v1512, %v1554
    %v1556 = vpop.f32.mrb[0].mxu0
    %v1557 = vadd.f32 %v1514, %v1556
    %v1558 = vpop.f32.mrb[0].mxu0
    %v1559 = vadd.f32 %v1516, %v1558
    %1560 = vdwg.mxu0
    %1561 = vmatprep.subr.bf16.mxu0 %v1059
    %1562 = vmatpush1.bf16.msra.mxu0 %v1058
    %1563 = vmatprep.subr.bf16.mxu0 0
    %1564 = vmatpush1.bf16.msra.mxu0 0
    %1565 = vmatprep.subr.bf16.mxu0 0
    %1566 = vmatpush1.bf16.msra.mxu0 0
    %1567 = vmatprep.subr.bf16.mxu0 0
    %1568 = vmatpush1.bf16.msra.mxu0 0
    %1569 = vmatprep.subr.bf16.mxu0 0
    %1570 = vmatpush1.bf16.msra.mxu0 0
    %1571 = vmatprep.subr.bf16.mxu0 0
    %1572 = vmatpush1.bf16.msra.mxu0 0
    %1573 = vmatprep.subr.bf16.mxu0 0
    %1574 = vmatpush1.bf16.msra.mxu0 0
    %1575 = vmatprep.subr.bf16.mxu0 0
    %1576 = vmatpush1.bf16.msra.mxu0 0
    %1577 = vmatprep.subr.bf16.mxu0 0
    %1578 = vmatpush1.bf16.msra.mxu0 0
    %1579 = vmatprep.subr.bf16.mxu0 0
    %1580 = vmatpush1.bf16.msra.mxu0 0
    %1581 = vmatprep.subr.bf16.mxu0 0
    %1582 = vmatpush1.bf16.msra.mxu0 0
    %1583 = vmatprep.subr.bf16.mxu0 0
    %1584 = vmatpush1.bf16.msra.mxu0 0
    %1585 = vmatprep.subr.bf16.mxu0 0
    %1586 = vmatpush1.bf16.msra.mxu0 0
    %1587 = vmatprep.subr.bf16.mxu0 0
    %1588 = vmatpush1.bf16.msra.mxu0 0
    %1589 = vmatprep.subr.bf16.mxu0 0
    %1590 = vmatpush1.bf16.msra.mxu0 0
    %1591 = vmatprep.subr.bf16.mxu0 0
    %1592 = vmatpush1.bf16.msra.mxu0 0
    %1593 = vmatprep.mubr.bf16.mxu0 0
    %1594 = vmatmul.mubr.bf16.gmra.mrb[0].mxu0 %v1258
    %v1595 = vpop.f32.mrb[0].mxu0
    %v1596 = vadd.f32 %v1553, %v1595
    %v1597 = vpop.f32.mrb[0].mxu0
    %v1598 = vadd.f32 %v1555, %v1597
    %v1599 = vpop.f32.mrb[0].mxu0
    %v1600 = vadd.f32 %v1557, %v1599
    %v1601 = vpop.f32.mrb[0].mxu0
    %v1602 = vadd.f32 %v1559, %v1601
    %1603 = vdwg.mxu0
    %v1604 = vadd.f32 %v1424, 0.0
    %v1605 = vadd.f32 %v1426, 0.0
    %v1606 = vadd.f32 %v1596, 0.0
    %v1607 = vadd.f32 %v1598, 0.0
    %vm1608 = vcmp.gt.f32.partialorder %v1604, 1.0
    %vm1609 = vcmp.gt.f32.partialorder %v1605, 1.0
    %vm1610 = vcmp.gt.f32.partialorder %v1606, 1.0
    %vm1611 = vcmp.gt.f32.partialorder %v1607, 1.0
    %v1612 = vsel %vm1608, 1, 0
    %v1613 = vsel %vm1609, 1, 0
    %v1614 = vsel %vm1610, 1, 0
    %v1615 = vsel %vm1611, 1, 0
    %v1616 = vcvt.s32.f32 %v1612
    %v1617 = vcvt.s32.f32 %v1613
    %v1618 = vcvt.s32.f32 %v1614
    %v1619 = vcvt.s32.f32 %v1615
    %v1620 = vsub.f32 1.0, %v1616
    %v1621 = vsub.f32 1.0, %v1617
    %v1622 = vsub.f32 1.0, %v1618
    %v1623 = vsub.f32 1.0, %v1619
    %v1624 = vmul.f32 %v1604, %v1620
    %v1625 = vmul.f32 %v1605, %v1621
    %v1626 = vmul.f32 %v1606, %v1622
    %v1627 = vmul.f32 %v1607, %v1623
    %v1628 = vadd.f32 %v1616, 0.0
    %v1629 = vadd.f32 %v1617, 0.0
    %v1630 = vadd.f32 %v1618, 0.0
    %v1631 = vadd.f32 %v1619, 0.0
    %v1632 = vmul.f32 %v1624, 0.25
    %v1633 = vmul.f32 %v1625, 0.25
    %v1634 = vmul.f32 %v1626, 0.25
    %v1635 = vmul.f32 %v1627, 0.25
    %v1640 = vrot.slane %v1424, 2
    %v1641 = vrot.slane %v1426, 2
    %v1642 = vrot.slane %v1596, 2
    %v1643 = vrot.slane %v1598, 2
    %v1648 = vadd.f32 %v1632, %v1640
    %v1649 = vadd.f32 %v1633, %v1641
    %v1650 = vadd.f32 %v1634, %v1642
    %v1651 = vadd.f32 %v1635, %v1643
    %vm1652 = vcmp.gt.f32.partialorder %v1648, 1.0
    %vm1653 = vcmp.gt.f32.partialorder %v1649, 1.0
    %vm1654 = vcmp.gt.f32.partialorder %v1650, 1.0
    %vm1655 = vcmp.gt.f32.partialorder %v1651, 1.0
    %v1656 = vsel %vm1652, 1, 0
    %v1657 = vsel %vm1653, 1, 0
    %v1658 = vsel %vm1654, 1, 0
    %v1659 = vsel %vm1655, 1, 0
    %v1660 = vcvt.s32.f32 %v1656
    %v1661 = vcvt.s32.f32 %v1657
    %v1662 = vcvt.s32.f32 %v1658
    %v1663 = vcvt.s32.f32 %v1659
    %v1664 = vsub.f32 1.0, %v1660
    %v1665 = vsub.f32 1.0, %v1661
    %v1666 = vsub.f32 1.0, %v1662
    %v1667 = vsub.f32 1.0, %v1663
    %v1668 = vmul.f32 %v1648, %v1664
    %v1669 = vmul.f32 %v1649, %v1665
    %v1670 = vmul.f32 %v1650, %v1666
    %v1671 = vmul.f32 %v1651, %v1667
    %v1672 = vadd.f32 %v1628, %v1660
    %v1673 = vadd.f32 %v1629, %v1661
    %v1674 = vadd.f32 %v1630, %v1662
    %v1675 = vadd.f32 %v1631, %v1663
    %v1676 = vmul.f32 %v1668, 0.25
    %v1677 = vmul.f32 %v1669, 0.25
    %v1678 = vmul.f32 %v1670, 0.25
    %v1679 = vmul.f32 %v1671, 0.25
    %v1680 = vrot.slane %v1424, 4
    %v1681 = vrot.slane %v1426, 4
    %v1682 = vrot.slane %v1596, 4
    %v1683 = vrot.slane %v1598, 4
    %v1688 = vadd.f32 %v1676, %v1680
    %v1689 = vadd.f32 %v1677, %v1681
    %v1690 = vadd.f32 %v1678, %v1682
    %v1691 = vadd.f32 %v1679, %v1683
    %vm1692 = vcmp.gt.f32.partialorder %v1688, 1.0
    %vm1693 = vcmp.gt.f32.partialorder %v1689, 1.0
    %vm1694 = vcmp.gt.f32.partialorder %v1690, 1.0
    %vm1695 = vcmp.gt.f32.partialorder %v1691, 1.0
    %v1696 = vsel %vm1692, 1, 0
    %v1697 = vsel %vm1693, 1, 0
    %v1698 = vsel %vm1694, 1, 0
    %v1699 = vsel %vm1695, 1, 0
    %v1700 = vcvt.s32.f32 %v1696
    %v1701 = vcvt.s32.f32 %v1697
    %v1702 = vcvt.s32.f32 %v1698
    %v1703 = vcvt.s32.f32 %v1699
    %v1704 = vsub.f32 1.0, %v1700
    %v1705 = vsub.f32 1.0, %v1701
    %v1706 = vsub.f32 1.0, %v1702
    %v1707 = vsub.f32 1.0, %v1703
    %v1708 = vmul.f32 %v1688, %v1704
    %v1709 = vmul.f32 %v1689, %v1705
    %v1710 = vmul.f32 %v1690, %v1706
    %v1711 = vmul.f32 %v1691, %v1707
    %v1712 = vadd.f32 %v1672, %v1700
    %v1713 = vadd.f32 %v1673, %v1701
    %v1714 = vadd.f32 %v1674, %v1702
    %v1715 = vadd.f32 %v1675, %v1703
    %v1716 = vmul.f32 %v1708, 0.25
    %v1717 = vmul.f32 %v1709, 0.25
    %v1718 = vmul.f32 %v1710, 0.25
    %v1719 = vmul.f32 %v1711, 0.25
    %v1720 = vrot.slane %v1424, 6
    %v1721 = vrot.slane %v1426, 6
    %v1722 = vrot.slane %v1596, 6
    %v1723 = vrot.slane %v1598, 6
    %v1728 = vadd.f32 %v1716, %v1720
    %v1729 = vadd.f32 %v1717, %v1721
    %v1730 = vadd.f32 %v1718, %v1722
    %v1731 = vadd.f32 %v1719, %v1723
    %vm1732 = vcmp.gt.f32.partialorder %v1728, 1.0
    %vm1733 = vcmp.gt.f32.partialorder %v1729, 1.0
    %vm1734 = vcmp.gt.f32.partialorder %v1730, 1.0
    %vm1735 = vcmp.gt.f32.partialorder %v1731, 1.0
    %v1736 = vsel %vm1732, 1, 0
    %v1737 = vsel %vm1733, 1, 0
    %v1738 = vsel %vm1734, 1, 0
    %v1739 = vsel %vm1735, 1, 0
    %v1740 = vcvt.s32.f32 %v1736
    %v1741 = vcvt.s32.f32 %v1737
    %v1742 = vcvt.s32.f32 %v1738
    %v1743 = vcvt.s32.f32 %v1739
    %v1744 = vsub.f32 1.0, %v1740
    %v1745 = vsub.f32 1.0, %v1741
    %v1746 = vsub.f32 1.0, %v1742
    %v1747 = vsub.f32 1.0, %v1743
    %v1748 = vmul.f32 %v1728, %v1744
    %v1749 = vmul.f32 %v1729, %v1745
    %v1750 = vmul.f32 %v1730, %v1746
    %v1751 = vmul.f32 %v1731, %v1747
    %v1752 = vadd.f32 %v1712, %v1740
    %v1753 = vadd.f32 %v1713, %v1741
    %v1754 = vadd.f32 %v1714, %v1742
    %v1755 = vadd.f32 %v1715, %v1743
    %v1756 = vmul.f32 %v1748, 0.25
    %v1757 = vmul.f32 %v1749, 0.25
    %v1758 = vmul.f32 %v1750, 0.25
    %v1759 = vmul.f32 %v1751, 0.25
    %v1760 = vadd.f32 %v1756, %v1428
    %v1761 = vadd.f32 %v1757, %v1430
    %v1762 = vadd.f32 %v1758, %v1600
    %v1763 = vadd.f32 %v1759, %v1602
    %vm1764 = vcmp.gt.f32.partialorder %v1760, 1.0
    %vm1765 = vcmp.gt.f32.partialorder %v1761, 1.0
    %vm1766 = vcmp.gt.f32.partialorder %v1762, 1.0
    %vm1767 = vcmp.gt.f32.partialorder %v1763, 1.0
    %v1768 = vsel %vm1764, 1, 0
    %v1769 = vsel %vm1765, 1, 0
    %v1770 = vsel %vm1766, 1, 0
    %v1771 = vsel %vm1767, 1, 0
    %v1772 = vcvt.s32.f32 %v1768
    %v1773 = vcvt.s32.f32 %v1769
    %v1774 = vcvt.s32.f32 %v1770
    %v1775 = vcvt.s32.f32 %v1771
    %v1776 = vsub.f32 1.0, %v1772
    %v1777 = vsub.f32 1.0, %v1773
    %v1778 = vsub.f32 1.0, %v1774
    %v1779 = vsub.f32 1.0, %v1775
    %v1780 = vmul.f32 %v1760, %v1776
    %v1781 = vmul.f32 %v1761, %v1777
    %v1782 = vmul.f32 %v1762, %v1778
    %v1783 = vmul.f32 %v1763, %v1779
    %v1784 = vadd.f32 %v1752, %v1772
    %v1785 = vadd.f32 %v1753, %v1773
    %v1786 = vadd.f32 %v1754, %v1774
    %v1787 = vadd.f32 %v1755, %v1775
    %v1788 = vmul.f32 %v1780, 0.25
    %v1789 = vmul.f32 %v1781, 0.25
    %v1790 = vmul.f32 %v1782, 0.25
    %v1791 = vmul.f32 %v1783, 0.25
    %v1796 = vrot.slane %v1428, 2
    %v1797 = vrot.slane %v1430, 2
    %v1798 = vrot.slane %v1600, 2
    %v1799 = vrot.slane %v1602, 2
    %v1804 = vadd.f32 %v1788, %v1796
    %v1805 = vadd.f32 %v1789, %v1797
    %v1806 = vadd.f32 %v1790, %v1798
    %v1807 = vadd.f32 %v1791, %v1799
    %vm1808 = vcmp.gt.f32.partialorder %v1804, 1.0
    %vm1809 = vcmp.gt.f32.partialorder %v1805, 1.0
    %vm1810 = vcmp.gt.f32.partialorder %v1806, 1.0
    %vm1811 = vcmp.gt.f32.partialorder %v1807, 1.0
    %v1812 = vsel %vm1808, 1, 0
    %v1813 = vsel %vm1809, 1, 0
    %v1814 = vsel %vm1810, 1, 0
    %v1815 = vsel %vm1811, 1, 0
    %v1816 = vcvt.s32.f32 %v1812
    %v1817 = vcvt.s32.f32 %v1813
    %v1818 = vcvt.s32.f32 %v1814
    %v1819 = vcvt.s32.f32 %v1815
    %v1820 = vsub.f32 1.0, %v1816
    %v1821 = vsub.f32 1.0, %v1817
    %v1822 = vsub.f32 1.0, %v1818
    %v1823 = vsub.f32 1.0, %v1819
    %v1824 = vmul.f32 %v1804, %v1820
    %v1825 = vmul.f32 %v1805, %v1821
    %v1826 = vmul.f32 %v1806, %v1822
    %v1827 = vmul.f32 %v1807, %v1823
    %v1828 = vadd.f32 %v1784, %v1816
    %v1829 = vadd.f32 %v1785, %v1817
    %v1830 = vadd.f32 %v1786, %v1818
    %v1831 = vadd.f32 %v1787, %v1819
    %v1832 = vmul.f32 %v1824, 0.25
    %v1833 = vmul.f32 %v1825, 0.25
    %v1834 = vmul.f32 %v1826, 0.25
    %v1835 = vmul.f32 %v1827, 0.25
    %v1836 = vrot.slane %v1428, 4
    %v1837 = vrot.slane %v1430, 4
    %v1838 = vrot.slane %v1600, 4
    %v1839 = vrot.slane %v1602, 4
    %v1844 = vadd.f32 %v1832, %v1836
    %v1845 = vadd.f32 %v1833, %v1837
    %v1846 = vadd.f32 %v1834, %v1838
    %v1847 = vadd.f32 %v1835, %v1839
    %vm1848 = vcmp.gt.f32.partialorder %v1844, 1.0
    %vm1849 = vcmp.gt.f32.partialorder %v1845, 1.0
    %vm1850 = vcmp.gt.f32.partialorder %v1846, 1.0
    %vm1851 = vcmp.gt.f32.partialorder %v1847, 1.0
    %v1852 = vsel %vm1848, 1, 0
    %v1853 = vsel %vm1849, 1, 0
    %v1854 = vsel %vm1850, 1, 0
    %v1855 = vsel %vm1851, 1, 0
    %v1856 = vcvt.s32.f32 %v1852
    %v1857 = vcvt.s32.f32 %v1853
    %v1858 = vcvt.s32.f32 %v1854
    %v1859 = vcvt.s32.f32 %v1855
    %v1860 = vsub.f32 1.0, %v1856
    %v1861 = vsub.f32 1.0, %v1857
    %v1862 = vsub.f32 1.0, %v1858
    %v1863 = vsub.f32 1.0, %v1859
    %v1864 = vmul.f32 %v1844, %v1860
    %v1865 = vmul.f32 %v1845, %v1861
    %v1866 = vmul.f32 %v1846, %v1862
    %v1867 = vmul.f32 %v1847, %v1863
    %v1868 = vadd.f32 %v1828, %v1856
    %v1869 = vadd.f32 %v1829, %v1857
    %v1870 = vadd.f32 %v1830, %v1858
    %v1871 = vadd.f32 %v1831, %v1859
    %v1872 = vmul.f32 %v1864, 0.25
    %v1873 = vmul.f32 %v1865, 0.25
    %v1874 = vmul.f32 %v1866, 0.25
    %v1875 = vmul.f32 %v1867, 0.25
    %v1876 = vrot.slane %v1428, 6
    %v1877 = vrot.slane %v1430, 6
    %v1878 = vrot.slane %v1600, 6
    %v1879 = vrot.slane %v1602, 6
    %v1884 = vadd.f32 %v1872, %v1876
    %v1885 = vadd.f32 %v1873, %v1877
    %v1886 = vadd.f32 %v1874, %v1878
    %v1887 = vadd.f32 %v1875, %v1879
    %vm1888 = vcmp.gt.f32.partialorder %v1884, 1.0
    %vm1889 = vcmp.gt.f32.partialorder %v1885, 1.0
    %vm1890 = vcmp.gt.f32.partialorder %v1886, 1.0
    %vm1891 = vcmp.gt.f32.partialorder %v1887, 1.0
    %v1892 = vsel %vm1888, 1, 0
    %v1893 = vsel %vm1889, 1, 0
    %v1894 = vsel %vm1890, 1, 0
    %v1895 = vsel %vm1891, 1, 0
    %v1896 = vcvt.s32.f32 %v1892
    %v1897 = vcvt.s32.f32 %v1893
    %v1898 = vcvt.s32.f32 %v1894
    %v1899 = vcvt.s32.f32 %v1895
    %v1900 = vadd.f32 %v1868, %v1896
    %v1901 = vadd.f32 %v1869, %v1897
    %v1902 = vadd.f32 %v1870, %v1898
    %v1903 = vadd.f32 %v1871, %v1899
    %v1904 = vld [vmem:[%s3] sm:$0xf]
    %v1906 = vlaneseq
    %v1907 = vshrl.u32 %v1906, 7
    %v1908 = vsub.s32 0, %v1907
    %v1909 = vrot.slane %v1904, %v1908
    %v1910 = vlaneseq
    %v1911 = vshrl.u32 %v1910, 7
    %v1912 = vsub.s32 1, %v1911
    %v1913 = vrot.slane %v1904, %v1912
    %v1914 = vlaneseq
    %v1915 = vshrl.u32 %v1914, 7
    %v1916 = vsub.s32 2, %v1915
    %v1917 = vrot.slane %v1904, %v1916
    %v1918 = vlaneseq
    %v1919 = vshrl.u32 %v1918, 7
    %v1920 = vsub.s32 3, %v1919
    %v1921 = vrot.slane %v1904, %v1920
    %v1926 = vmul.f32 %v1900, %v1909
    %v1927 = vmul.f32 %v1901, %v1913
    %v1928 = vmul.f32 %v1902, %v1917
    %v1929 = vmul.f32 %v1903, %v1921
    %vm1930 = vcmask 1041408
    %v1931 = vsel %vm1930, %v1926, 0.0
    %v1932 = vsel %vm1930, %v1927, 0.0
    %v1933 = vadd.f32 %v1931, %v1932
    %v1934 = vsel %vm1930, %v1928, 0.0
    %v1935 = vadd.f32 %v1933, %v1934
    %v1936 = vsel %vm1930, %v1929, 0.0
    %v1937 = vadd.f32 %v1935, %v1936
    %1938 = vadd.xlane.f32.xlu0 %v1937
    %v1939 = vpop.xlane.xlu0 %1938
    %v1940 = vld [vmem:[#allocation2] sm:$0x1]
    %v1941 = vmul.f32 %v1940, 8.0
    %v1943 = vlaneseq
    %v1944 = vshrl.u32 %v1943, 7
    %v1945 = vsub.s32 0, %v1944
    %v1946 = vrot.slane %v1941, %v1945
    %v1948 = vadd.f32 %v1939, %v1946
    %v1949 = vmul.f32 %v1948, 0.125
    %v1950 = vxor.u32 %v1949, 2147483648
    %v1951 = vmul.f32 %v1950, 1.442695
    %v1952 = vpow.pop %v1951
    %v1953 = vadd.f32 %v1952, 1.0
    %v1954 = vrcp.pop %v1953
    %v1955 = vmul.f32 1.0, %v1954
    %vm1956 = vcmask 1024
    %1957 = vst.msk [vmem:[%s5] sm:$0x3] %vm1956, %v1955
    // Predicated region
    $region26: #{discriminator_mp.1} parent=1 // pred_check
      _
    $region27: #{discriminator_mp.1} parent=1 // pred_check_branch
      %1959 = sbr.rel (0) target = $region29
    $region28: #{discriminator_mp.1} parent=1 // pred_region
      _
    $region29: #{discriminator_mp.1} parent=1 // pred_fallthru
      _
    // Predicated region
    $region30: #{discriminator_mp.1} parent=1 // pred_check
      _
    $region31: #{discriminator_mp.1} parent=1 // pred_check_branch
      %1961 = sbr.rel (0) target = $region33
    $region32: #{discriminator_mp.1} parent=1 // pred_region
      _
    $region33: #{discriminator_mp.1} parent=1 // pred_fallthru
      _
    %1962 = vsyncpa [#allocation4], 1

</llo_original>
